<compile_context>
chip_gen: v6e
topology: v6e:2x2x1
jax: 0.10.0
libtpu: 0.0.40
codegen_flags: <defaults>
</compile_context>

<pallas_src>
import math
from functools import partial

import jax
import jax.numpy as jnp
from jax.experimental import pallas as pl
from jax.experimental.pallas import tpu as pltpu


def _fused_attention_kernel(x_ref, wq_ref, wkv_ref, bq_ref, bkv_ref, o_ref,
                            q_scr, m_scr, l_scr, acc_scr, *,
                            scale, tq, tk, e, seq_len, needs_mask):
    """Grid = (batch, q_tiles, kv_tiles).

    x_ref holds the full (padded) sequence for one batch element, resident in
    VMEM (its index_map is constant over both tile axes); Q and KV tiles are
    sliced from it in-kernel so x is only DMA'd from HBM once per batch
    element.  The inner ("arbitrary") axis walks KV tiles with a flash-style
    online-softmax accumulator in VMEM scratch.
    """
    qi = pl.program_id(1)
    ki = pl.program_id(2)

    @pl.when(ki == 0)
    def _init():
        # Q projection for this query tile: computed once per (b, qi),
        # pre-scaled by 1/sqrt(E), kept resident as a bf16 MXU operand.
        xq = x_ref[0, pl.ds(pl.multiple_of(qi * tq, tq), tq), :]
        q = jnp.dot(xq, wq_ref[...],
                    preferred_element_type=jnp.float32) + bq_ref[...]
        q_scr[...] = (q * scale).astype(jnp.bfloat16)
        m_scr[...] = jnp.full_like(m_scr, -jnp.inf)
        l_scr[...] = jnp.zeros_like(l_scr)
        acc_scr[...] = jnp.zeros_like(acc_scr)

    # Fused K/V projection for this KV tile (single (tk, E) x (E, 2E) matmul
    # fills the 256-wide MXU on v6e/v7x).  Never written back to HBM.
    xkv = x_ref[0, pl.ds(pl.multiple_of(ki * tk, tk), tk), :]
    kv = jnp.dot(xkv, wkv_ref[...],
                 preferred_element_type=jnp.float32) + bkv_ref[...]
    k = kv[:, :e]          # lane-aligned slices (E is a multiple of 128)
    v = kv[:, e:]

    # Scores for this tile: (tq, tk) in f32 (Q already carries 1/sqrt(E)).
    s = jax.lax.dot_general(
        q_scr[...], k.astype(jnp.bfloat16),
        dimension_numbers=(((1,), (1,)), ((), ())),
        preferred_element_type=jnp.float32)

    if needs_mask:
        # Mask padded key columns (padding rows of x still get a bias-driven
        # nonzero K, so they must be excluded from the softmax).
        col = ki * tk + jax.lax.broadcasted_iota(jnp.int32, (tq, tk), 1)
        s = jnp.where(col < seq_len, s, jnp.float32(-1e30))

    # Online softmax update — f32 on the VPU (v5e has no bf16 VPU).
    m_new = jnp.maximum(m_scr[...], jnp.max(s, axis=-1, keepdims=True))
    alpha = jnp.exp(m_scr[...] - m_new)
    p = jnp.exp(s - m_new)
    l_scr[...] = alpha * l_scr[...] + jnp.sum(p, axis=-1, keepdims=True)
    acc_scr[...] = alpha * acc_scr[...] + jnp.dot(
        p.astype(jnp.bfloat16), v.astype(jnp.bfloat16),
        preferred_element_type=jnp.float32)
    m_scr[...] = m_new

    @pl.when(ki == pl.num_programs(2) - 1)
    def _finalize():
        inv_l = pl.reciprocal(l_scr[...], approx=True)
        o_ref[0] = (acc_scr[...] * inv_l).astype(o_ref.dtype)


def attention_forward(x, wq, wk, wv, bq, bk, bv, *, q_tile=256, kv_tile=256):
    """out = softmax((x@wq+bq)(x@wk+bk)^T / sqrt(E)) (x@wv+bv), fully fused.

    x: (B, T, E); wq/wk/wv: (E, E); bq/bk/bv: (E,).
    """
    B, T, E = x.shape
    scale = 1.0 / math.sqrt(E)

    tq, tk = q_tile, kv_tile
    ell = math.lcm(tq, tk)
    Tp = int(pl.cdiv(T, ell)) * ell          # pad so both tiles divide
    needs_mask = (Tp != T)

    # bf16 MXU operands prepared once at the boundary (no per-step casts).
    x_bf = x.astype(jnp.bfloat16)
    if needs_mask:
        x_bf = jnp.pad(x_bf, ((0, 0), (0, Tp - T), (0, 0)))
    wq_bf = wq.astype(jnp.bfloat16)
    wkv_bf = jnp.concatenate([wk, wv], axis=1).astype(jnp.bfloat16)   # (E, 2E)
    bq_f = bq.reshape(1, E).astype(jnp.float32)
    bkv_f = jnp.concatenate([bk, bv]).reshape(1, 2 * E).astype(jnp.float32)

    nq = Tp // tq
    nkv = Tp // tk

    out_itemsize = jnp.dtype(x.dtype).itemsize
    cost = pl.CostEstimate(
        flops=2 * B * (3 * T * E * E + 2 * T * T * E),
        transcendentals=B * T * T,
        bytes_accessed=(B * Tp * E * 2 + 3 * E * E * 2 + 3 * E * 4
                        + B * Tp * E * out_itemsize),
    )

    # Explicit VMEM budget (valid on v5e/v6e/v7x: >= 32 MiB, <= 64 MiB).
    vmem_needed = (
        2 * Tp * E * 2                    # resident x (bf16), double-buffered
        + 2 * tq * E * out_itemsize       # output block, double-buffered
        + 2 * 3 * E * E * 2               # wq + wkv (bf16)
        + 2 * 3 * E * 4                   # biases (f32)
        + tq * E * 2                      # q scratch (bf16)
        + 2 * tq * 128 * 4                # m / l (lane-padded)
        + tq * E * 4                      # acc (f32)
        + 6 * tq * tk * 4                 # score / p temporaries headroom
    )
    vmem_limit = int(min(max(32 * 1024 * 1024, 2 * vmem_needed),
                         64 * 1024 * 1024))

    grid_spec = pltpu.PrefetchScalarGridSpec(
        num_scalar_prefetch=0,
        grid=(B, nq, nkv),
        in_specs=[
            # Full-sequence x: block index constant over (qi, ki) -> fetched
            # once per batch element, resident in VMEM; Q and KV tiles are
            # sliced from it in-kernel (no duplicate x stream).
            pl.BlockSpec((1, Tp, E), lambda b, qi, ki: (b, 0, 0)),
            pl.BlockSpec((E, E), lambda b, qi, ki: (0, 0)),        # wq
            pl.BlockSpec((E, 2 * E), lambda b, qi, ki: (0, 0)),    # wk||wv
            pl.BlockSpec((1, E), lambda b, qi, ki: (0, 0)),        # bq
            pl.BlockSpec((1, 2 * E), lambda b, qi, ki: (0, 0)),    # bk||bv
        ],
        out_specs=pl.BlockSpec((1, tq, E), lambda b, qi, ki: (b, qi, 0)),
        scratch_shapes=[
            pltpu.VMEM((tq, E), jnp.bfloat16),   # pre-scaled Q tile
            pltpu.VMEM((tq, 1), jnp.float32),    # running max m
            pltpu.VMEM((tq, 1), jnp.float32),    # running denom l
            pltpu.VMEM((tq, E), jnp.float32),    # output accumulator
        ],
    )

    out = pl.pallas_call(
        partial(_fused_attention_kernel, scale=scale, tq=tq, tk=tk, e=E,
                seq_len=T, needs_mask=needs_mask),
        out_shape=jax.ShapeDtypeStruct((B, Tp, E), x.dtype),
        grid_spec=grid_spec,
        compiler_params=pltpu.CompilerParams(
            dimension_semantics=("parallel", "parallel", "arbitrary"),
            vmem_limit_bytes=vmem_limit),
        cost_estimate=cost,
    )(x_bf, wq_bf, wkv_bf, bq_f, bkv_f)

    return out[:, :T, :] if needs_mask else out


def attention_reference(x, wq, wk, wv, bq, bk, bv):
    """Pure-JAX reference matching the PyTorch module (single head)."""
    E = x.shape[-1]
    q = x @ wq + bq
    k = x @ wk + bk
    v = x @ wv + bv
    s = jnp.einsum("btd,bsd->bts", q, k) / math.sqrt(E)
    p = jax.nn.softmax(s, axis=-1)
    return jnp.einsum("bts,bsd->btd", p, v)


if __name__ == "__main__":
    # T=200 is deliberately NOT a multiple of the 128 tile so the cdiv
    # padding + in-kernel column masking path is exercised; 2 Q tiles and
    # 2 KV tiles exercise the online-softmax accumulation and the parallel
    # query-tile axis.  E = 128 keeps everything lane-dense.
    B, T, E = 2, 200, 128

    key = jax.random.PRNGKey(0)
    kx, k0, k1, k2, k3, k4, k5 = jax.random.split(key, 7)
    bound = 1.0 / math.sqrt(E)  # torch nn.Linear default init range
    x = jax.random.normal(kx, (B, T, E), jnp.float32)
    wq = jax.random.uniform(k0, (E, E), jnp.float32, -bound, bound)
    wk = jax.random.uniform(k1, (E, E), jnp.float32, -bound, bound)
    wv = jax.random.uniform(k2, (E, E), jnp.float32, -bound, bound)
    bq = jax.random.uniform(k3, (E,), jnp.float32, -bound, bound)
    bk = jax.random.uniform(k4, (E,), jnp.float32, -bound, bound)
    bv = jax.random.uniform(k5, (E,), jnp.float32, -bound, bound)

    fwd = jax.jit(partial(attention_forward, q_tile=128, kv_tile=128))
    out = fwd(x, wq, wk, wv, bq, bk, bv)
    jax.block_until_ready(out)

    ref = attention_reference(x, wq, wk, wv, bq, bk, bv)
    assert out.shape == (B, T, E)
    # bf16 MXU operands with f32 accumulation -> loose tolerance vs reference.
    assert jnp.allclose(out, ref, atol=2e-2, rtol=5e-2), (
        float(jnp.max(jnp.abs(out - ref))))
    print("KERNEL_OK")
</pallas_src>

<mosaic_0001>
module attributes {stable_mosaic.version = 11 : i64} {
  func.func @_fused_attention_kernel(%arg0: i32, %arg1: i32, %arg2: i32, %arg3: memref<1x256x128xbf16, #tpu.memory_space<vmem>>, %arg4: memref<128x128xbf16, #tpu.memory_space<vmem>>, %arg5: memref<128x256xbf16, #tpu.memory_space<vmem>>, %arg6: memref<1x128xf32, #tpu.memory_space<vmem>>, %arg7: memref<1x256xf32, #tpu.memory_space<vmem>>, %arg8: memref<1x128x128xf32, #tpu.memory_space<vmem>>, %arg9: memref<128x128xbf16, #tpu.memory_space<vmem>>, %arg10: memref<128x1xf32, #tpu.memory_space<vmem>>, %arg11: memref<128x1xf32, #tpu.memory_space<vmem>>, %arg12: memref<128x128xf32, #tpu.memory_space<vmem>>) attributes {dimension_semantics = [#tpu.dimension_semantics<parallel>, #tpu.dimension_semantics<parallel>, #tpu.dimension_semantics<arbitrary>], iteration_bounds = array<i64: 2, 2, 2>, scalar_prefetch = 0 : i64, scratch_operands = 4 : i64, tpu.core_type = #tpu.core_type<tc>, window_params = [{transform_indices = @transform_0, window_bounds = array<i64: 1, 256, 128>}, {pipeline_mode = #tpu.pipeline_mode<synchronous>, transform_indices = @transform_1, window_bounds = array<i64: 128, 128>}, {pipeline_mode = #tpu.pipeline_mode<synchronous>, transform_indices = @transform_2, window_bounds = array<i64: 128, 256>}, {pipeline_mode = #tpu.pipeline_mode<synchronous>, transform_indices = @transform_3, window_bounds = array<i64: 1, 128>}, {pipeline_mode = #tpu.pipeline_mode<synchronous>, transform_indices = @transform_4, window_bounds = array<i64: 1, 256>}, {transform_indices = @transform_5, window_bounds = array<i64: 1, 128, 128>}]} {
    %c0_i32 = arith.constant 0 : i32
    %0 = arith.cmpi eq, %arg2, %c0_i32 : i32
    %1 = arith.extui %0 : i1 to i32
    %c0_i32_0 = arith.constant 0 : i32
    %2 = arith.cmpi ne, %1, %c0_i32_0 : i32
    scf.if %2 {
      %c128_i32_29 = arith.constant 128 : i32
      %54 = arith.muli %arg1, %c128_i32_29 : i32
      %55 = tpu.assume_multiple %54, 128 : i32
      %c0_30 = arith.constant 0 : index
      %56 = arith.index_cast %55 : i32 to index
      %c0_31 = arith.constant 0 : index
      %57 = vector.load %arg3[%c0_30, %56, %c0_31] : memref<1x256x128xbf16, #tpu.memory_space<vmem>>, vector<1x128x128xbf16>
      %58 = vector.shape_cast %57 : vector<1x128x128xbf16> to vector<128x128xbf16>
      %c0_32 = arith.constant 0 : index
      %c0_33 = arith.constant 0 : index
      %59 = vector.load %arg4[%c0_32, %c0_33] : memref<128x128xbf16, #tpu.memory_space<vmem>>, vector<128x128xbf16>
      %cst_34 = arith.constant dense<0.000000e+00> : vector<128x128xf32>
      %60 = tpu.matmul %58, %59, %cst_34 {dimension_numbers = #tpu.dot_dimension_numbers<[1], [0], [0], [1], [0, 0, 1, 1], [], []>} : vector<128x128xbf16>, vector<128x128xbf16>, vector<128x128xf32> -> vector<128x128xf32>
      %c0_35 = arith.constant 0 : index
      %c0_36 = arith.constant 0 : index
      %61 = vector.load %arg6[%c0_35, %c0_36] : memref<1x128xf32, #tpu.memory_space<vmem>>, vector<1x128xf32>
      %62 = vector.broadcast %61 : vector<1x128xf32> to vector<128x128xf32>
      %63 = arith.addf %60, %62 : vector<128x128xf32>
      %cst_37 = arith.constant 0.0883883461 : f32
      %64 = vector.broadcast %cst_37 : f32 to vector<128x128xf32>
      %65 = arith.mulf %63, %64 : vector<128x128xf32>
      %66 = arith.truncf %65 : vector<128x128xf32> to vector<128x128xbf16>
      %c0_38 = arith.constant 0 : index
      %c0_39 = arith.constant 0 : index
      %67 = vector.load %arg9[%c0_38, %c0_39] : memref<128x128xbf16, #tpu.memory_space<vmem>>, vector<128x128xbf16>
      tpu.vector_store %arg9[%c0_38, %c0_39], %66 {strides = array<i32>} : memref<128x128xbf16, #tpu.memory_space<vmem>>, vector<128x128xbf16>,
      %cst_40 = arith.constant 0xFF800000 : f32
      %68 = vector.broadcast %cst_40 : f32 to vector<128x1xf32>
      %c0_41 = arith.constant 0 : index
      %c0_42 = arith.constant 0 : index
      %69 = vector.load %arg10[%c0_41, %c0_42] : memref<128x1xf32, #tpu.memory_space<vmem>>, vector<128x1xf32>
      tpu.vector_store %arg10[%c0_41, %c0_42], %68 {strides = array<i32>} : memref<128x1xf32, #tpu.memory_space<vmem>>, vector<128x1xf32>,
      %cst_43 = arith.constant 0.000000e+00 : f32
      %70 = vector.broadcast %cst_43 : f32 to vector<128x1xf32>
      %c0_44 = arith.constant 0 : index
      %c0_45 = arith.constant 0 : index
      %71 = vector.load %arg11[%c0_44, %c0_45] : memref<128x1xf32, #tpu.memory_space<vmem>>, vector<128x1xf32>
      tpu.vector_store %arg11[%c0_44, %c0_45], %70 {strides = array<i32>} : memref<128x1xf32, #tpu.memory_space<vmem>>, vector<128x1xf32>,
      %cst_46 = arith.constant 0.000000e+00 : f32
      %72 = vector.broadcast %cst_46 : f32 to vector<128x128xf32>
      %c0_47 = arith.constant 0 : index
      %c0_48 = arith.constant 0 : index
      %73 = vector.load %arg12[%c0_47, %c0_48] : memref<128x128xf32, #tpu.memory_space<vmem>>, vector<128x128xf32>
      tpu.vector_store %arg12[%c0_47, %c0_48], %72 {strides = array<i32>} : memref<128x128xf32, #tpu.memory_space<vmem>>, vector<128x128xf32>,
    } else {
    }
    %c128_i32 = arith.constant 128 : i32
    %3 = arith.muli %arg2, %c128_i32 : i32
    %4 = tpu.assume_multiple %3, 128 : i32
    %c0 = arith.constant 0 : index
    %5 = arith.index_cast %4 : i32 to index
    %c0_1 = arith.constant 0 : index
    %6 = vector.load %arg3[%c0, %5, %c0_1] : memref<1x256x128xbf16, #tpu.memory_space<vmem>>, vector<1x128x128xbf16>
    %7 = vector.shape_cast %6 : vector<1x128x128xbf16> to vector<128x128xbf16>
    %c0_2 = arith.constant 0 : index
    %c0_3 = arith.constant 0 : index
    %8 = vector.load %arg5[%c0_2, %c0_3] : memref<128x256xbf16, #tpu.memory_space<vmem>>, vector<128x256xbf16>
    %cst = arith.constant dense<0.000000e+00> : vector<128x256xf32>
    %9 = tpu.matmul %7, %8, %cst {dimension_numbers = #tpu.dot_dimension_numbers<[1], [0], [0], [1], [0, 0, 1, 1], [], []>} : vector<128x128xbf16>, vector<128x256xbf16>, vector<128x256xf32> -> vector<128x256xf32>
    %c0_4 = arith.constant 0 : index
    %c0_5 = arith.constant 0 : index
    %10 = vector.load %arg7[%c0_4, %c0_5] : memref<1x256xf32, #tpu.memory_space<vmem>>, vector<1x256xf32>
    %11 = vector.broadcast %10 : vector<1x256xf32> to vector<128x256xf32>
    %12 = arith.addf %9, %11 : vector<128x256xf32>
    %13 = vector.extract_strided_slice %12 {offsets = [0, 0], sizes = [128, 128], strides = [1, 1]} : vector<128x256xf32> to vector<128x128xf32>
    %14 = vector.extract_strided_slice %12 {offsets = [0, 128], sizes = [128, 128], strides = [1, 1]} : vector<128x256xf32> to vector<128x128xf32>
    %c0_6 = arith.constant 0 : index
    %c0_7 = arith.constant 0 : index
    %15 = vector.load %arg9[%c0_6, %c0_7] : memref<128x128xbf16, #tpu.memory_space<vmem>>, vector<128x128xbf16>
    %16 = arith.truncf %13 : vector<128x128xf32> to vector<128x128xbf16>
    %cst_8 = arith.constant dense<0.000000e+00> : vector<128x128xf32>
    %17 = tpu.matmul %15, %16, %cst_8 {dimension_numbers = #tpu.dot_dimension_numbers<[1], [1], [0], [0], [0, 0, 1, 0], [], []>} : vector<128x128xbf16>, vector<128x128xbf16>, vector<128x128xf32> -> vector<128x128xf32>
    %c128_i32_9 = arith.constant 128 : i32
    %18 = arith.muli %arg2, %c128_i32_9 : i32
    %19 = tpu.iota {dimensions = array<i32: 1>} : vector<128x128xi32>
    %20 = vector.broadcast %18 : i32 to vector<128x128xi32>
    %21 = arith.addi %20, %19 : vector<128x128xi32>
    %c200_i32 = arith.constant 200 : i32
    %22 = vector.broadcast %c200_i32 : i32 to vector<128x128xi32>
    %23 = arith.cmpi slt, %21, %22 : vector<128x128xi32>
    %cst_10 = arith.constant -1.000000e+30 : f32
    %24 = vector.broadcast %cst_10 : f32 to vector<128x128xf32>
    %25 = arith.select %23, %17, %24 : vector<128x128xi1>, vector<128x128xf32>
    %c0_11 = arith.constant 0 : index
    %c0_12 = arith.constant 0 : index
    %26 = vector.load %arg10[%c0_11, %c0_12] : memref<128x1xf32, #tpu.memory_space<vmem>>, vector<128x1xf32>
    %cst_13 = arith.constant dense<0xFF800000> : vector<128xf32>
    %27 = vector.multi_reduction <maximumf>, %25, %cst_13 [1] : vector<128x128xf32> to vector<128xf32>
    %28 = vector.shape_cast %27 : vector<128xf32> to vector<128x1xf32>
    %29 = arith.maximumf %26, %28 : vector<128x1xf32>
    %c0_14 = arith.constant 0 : index
    %c0_15 = arith.constant 0 : index
    %30 = vector.load %arg10[%c0_14, %c0_15] : memref<128x1xf32, #tpu.memory_space<vmem>>, vector<128x1xf32>
    %31 = arith.subf %30, %29 : vector<128x1xf32>
    %32 = math.exp %31 : vector<128x1xf32>
    %33 = vector.broadcast %29 : vector<128x1xf32> to vector<128x128xf32>
    %34 = arith.subf %25, %33 : vector<128x128xf32>
    %35 = math.exp %34 : vector<128x128xf32>
    %c0_16 = arith.constant 0 : index
    %c0_17 = arith.constant 0 : index
    %36 = vector.load %arg11[%c0_16, %c0_17] : memref<128x1xf32, #tpu.memory_space<vmem>>, vector<128x1xf32>
    %37 = arith.mulf %32, %36 : vector<128x1xf32>
    %cst_18 = arith.constant dense<0.000000e+00> : vector<128xf32>
    %38 = vector.multi_reduction <add>, %35, %cst_18 [1] : vector<128x128xf32> to vector<128xf32>
    %39 = vector.shape_cast %38 : vector<128xf32> to vector<128x1xf32>
    %40 = arith.addf %37, %39 : vector<128x1xf32>
    %c0_19 = arith.constant 0 : index
    %c0_20 = arith.constant 0 : index
    %41 = vector.load %arg11[%c0_19, %c0_20] : memref<128x1xf32, #tpu.memory_space<vmem>>, vector<128x1xf32>
    tpu.vector_store %arg11[%c0_19, %c0_20], %40 {strides = array<i32>} : memref<128x1xf32, #tpu.memory_space<vmem>>, vector<128x1xf32>,
    %c0_21 = arith.constant 0 : index
    %c0_22 = arith.constant 0 : index
    %42 = vector.load %arg12[%c0_21, %c0_22] : memref<128x128xf32, #tpu.memory_space<vmem>>, vector<128x128xf32>
    %43 = vector.broadcast %32 : vector<128x1xf32> to vector<128x128xf32>
    %44 = arith.mulf %43, %42 : vector<128x128xf32>
    %45 = arith.truncf %35 : vector<128x128xf32> to vector<128x128xbf16>
    %46 = arith.truncf %14 : vector<128x128xf32> to vector<128x128xbf16>
    %cst_23 = arith.constant dense<0.000000e+00> : vector<128x128xf32>
    %47 = tpu.matmul %45, %46, %cst_23 {dimension_numbers = #tpu.dot_dimension_numbers<[1], [0], [0], [1], [0, 0, 1, 1], [], []>} : vector<128x128xbf16>, vector<128x128xbf16>, vector<128x128xf32> -> vector<128x128xf32>
    %48 = arith.addf %44, %47 : vector<128x128xf32>
    %c0_24 = arith.constant 0 : index
    %c0_25 = arith.constant 0 : index
    %49 = vector.load %arg12[%c0_24, %c0_25] : memref<128x128xf32, #tpu.memory_space<vmem>>, vector<128x128xf32>
    tpu.vector_store %arg12[%c0_24, %c0_25], %48 {strides = array<i32>} : memref<128x128xf32, #tpu.memory_space<vmem>>, vector<128x128xf32>,
    %c0_26 = arith.constant 0 : index
    %c0_27 = arith.constant 0 : index
    %50 = vector.load %arg10[%c0_26, %c0_27] : memref<128x1xf32, #tpu.memory_space<vmem>>, vector<128x1xf32>
    tpu.vector_store %arg10[%c0_26, %c0_27], %29 {strides = array<i32>} : memref<128x1xf32, #tpu.memory_space<vmem>>, vector<128x1xf32>,
    %c1_i32 = arith.constant 1 : i32
    %51 = arith.cmpi eq, %arg2, %c1_i32 : i32
    %52 = arith.extui %51 : i1 to i32
    %c0_i32_28 = arith.constant 0 : i32
    %53 = arith.cmpi ne, %52, %c0_i32_28 : i32
    scf.if %53 {
      %c0_29 = arith.constant 0 : index
      %c0_30 = arith.constant 0 : index
      %54 = vector.load %arg11[%c0_29, %c0_30] : memref<128x1xf32, #tpu.memory_space<vmem>>, vector<128x1xf32>
      %55 = tpu.reciprocal %54 {approx = true} : vector<128x1xf32> -> vector<128x1xf32>
      %c0_31 = arith.constant 0 : index
      %c0_32 = arith.constant 0 : index
      %56 = vector.load %arg12[%c0_31, %c0_32] : memref<128x128xf32, #tpu.memory_space<vmem>>, vector<128x128xf32>
      %57 = vector.broadcast %55 : vector<128x1xf32> to vector<128x128xf32>
      %58 = arith.mulf %56, %57 : vector<128x128xf32>
      %c0_33 = arith.constant 0 : index
      %c0_34 = arith.constant 0 : index
      %c0_35 = arith.constant 0 : index
      %59 = vector.load %arg8[%c0_33, %c0_34, %c0_35] : memref<1x128x128xf32, #tpu.memory_space<vmem>>, vector<1x128x128xf32>
      %60 = vector.shape_cast %59 : vector<1x128x128xf32> to vector<128x128xf32>
      %61 = vector.shape_cast %58 : vector<128x128xf32> to vector<1x128x128xf32>
      tpu.vector_store %arg8[%c0_33, %c0_34, %c0_35], %61 {strides = array<i32>} : memref<1x128x128xf32, #tpu.memory_space<vmem>>, vector<1x128x128xf32>,
    } else {
    }
    return
  }
  func.func @transform_0(%arg0: i32, %arg1: i32, %arg2: i32) -> (i32, i32, i32) {
    %c0_i32 = arith.constant 0 : i32
    %c0_i32_0 = arith.constant 0 : i32
    %c0_i32_1 = arith.constant 0 : i32
    return %arg0, %c0_i32, %c0_i32_0 : i32, i32, i32
  }
  func.func @transform_1(%arg0: i32, %arg1: i32, %arg2: i32) -> (i32, i32) {
    %c0_i32 = arith.constant 0 : i32
    %c0_i32_0 = arith.constant 0 : i32
    %c0_i32_1 = arith.constant 0 : i32
    return %c0_i32, %c0_i32_0 : i32, i32
  }
  func.func @transform_2(%arg0: i32, %arg1: i32, %arg2: i32) -> (i32, i32) {
    %c0_i32 = arith.constant 0 : i32
    %c0_i32_0 = arith.constant 0 : i32
    %c0_i32_1 = arith.constant 0 : i32
    return %c0_i32, %c0_i32_0 : i32, i32
  }
  func.func @transform_3(%arg0: i32, %arg1: i32, %arg2: i32) -> (i32, i32) {
    %c0_i32 = arith.constant 0 : i32
    %c0_i32_0 = arith.constant 0 : i32
    %c0_i32_1 = arith.constant 0 : i32
    return %c0_i32, %c0_i32_0 : i32, i32
  }
  func.func @transform_4(%arg0: i32, %arg1: i32, %arg2: i32) -> (i32, i32) {
    %c0_i32 = arith.constant 0 : i32
    %c0_i32_0 = arith.constant 0 : i32
    %c0_i32_1 = arith.constant 0 : i32
    return %c0_i32, %c0_i32_0 : i32, i32
  }
  func.func @transform_5(%arg0: i32, %arg1: i32, %arg2: i32) -> (i32, i32, i32) {
    %c0_i32 = arith.constant 0 : i32
    %c0_i32_0 = arith.constant 0 : i32
    return %arg0, %arg1, %c0_i32 : i32, i32, i32
  }
}

</mosaic_0001>

<llo_original>
// kernel: attention_forward.1
$region0: #{attention_forward.1}
  #allocation0 [shape = 'u32[]', space=smem, size = 0x4, offset = 0x4, fixed_abs, tag = 'smem constant byte address 0x4 - core index']
  #allocation1 [shape = 'u32[144,128]{1,0:T(1,128)}', space=vmem, size = 0x12000, scoped, tag = 'internal scratch']
  #allocation2 [shape = 'bf16[128,128]{1,0:T(8,128)(2,1)}', space=vmem, size = 0x8000, scoped, tag = 'scratch operand']
  #allocation3 [shape = 'f32[128,1]{1,0:T(8,128)}', space=vmem, size = 0x10000, scoped, tag = 'scratch operand']
  #allocation4 [shape = 'f32[128,1]{1,0:T(8,128)}', space=vmem, size = 0x10000, scoped, tag = 'scratch operand']
  #allocation5 [shape = 'f32[128,128]{1,0:T(8,128)}', space=vmem, size = 0x10000, scoped, tag = 'scratch operand']
  %s0 = inlined_call_operand.vmem [shape: bf16[2,256,128], index: 0, kind: input, shape index: {}]
  %s1 = inlined_call_operand.vmem [shape: bf16[128,128], index: 1, kind: input, shape index: {}]
  %s2 = inlined_call_operand.vmem [shape: bf16[128,256], index: 2, kind: input, shape index: {}]
  %s3 = inlined_call_operand.vmem [shape: f32[1,128], index: 3, kind: input, shape index: {}]
  %s4 = inlined_call_operand.vmem [shape: f32[1,256], index: 4, kind: input, shape index: {}]
  %s5 = inlined_call_operand.vmem [shape: f32[2,256,128], index: 5, kind: output, shape index: {}]
  %s6 = sld [smem:[#allocation0]]
  $region61: #{attention_forward.1} parent=0
    _
  %s8 = ssub.s32 1, %s6
  %s9 = scalar_select 0, %s8, %s6
  loop: start=0, step=1, limit=10
  $region2: #{attention_forward.1} parent=0 // loop_pre_header
    _
  $region3: #{attention_forward.1} parent=0 // loop_header
    %s11 = sphi 0, %s15
    %p12 = scmp.ge.s32.totalorder %s11, 10
    %s18 = sphi 0, %s37
    %s19 = sphi 0, %s33
    %s20 = sphi 0, %s29
    %s21 = sphi 0, %s18
    %s22 = sphi 0, %s19
    %s23 = sphi 0, %s20
    %s24 = sphi 0, %s21
    %s25 = sphi 0, %s22
    %s26 = sphi 0, %s23
    %s40 = sphi 0, %s42
    %s43 = sphi 0, %s40
    %s44 = sphi 0, %s43
    %s60 = sphi 0, %s44
    %s64 = sphi 0, %s64
    %s66 = sphi 0, %s64
    %s67 = sphi 0, %s66
    %s81 = sphi 0, %s67
    %s85 = sphi 0, %s85
    %s87 = sphi 0, %s85
    %s88 = sphi 0, %s87
    %s102 = sphi 0, %s88
    %s106 = sphi 0, %s106
    %s108 = sphi 0, %s106
    %s109 = sphi 0, %s108
    %s123 = sphi 0, %s109
    %s127 = sphi 0, %s127
    %s129 = sphi 0, %s127
    %s130 = sphi 0, %s129
    %s144 = sphi 0, %s130
    %s152 = sphi 0, %s154
    %s155 = sphi 0, %s152
    %s156 = sphi 0, %s155
    %s172 = sphi 0, %s156
  $region4: #{attention_forward.1} parent=0 // loop_header_branch
    %14 = sbr.rel (%p12) target = $region8
  $region5: #{attention_forward.1} parent=0 // loop_body
    %s16 = ssub.s32 %s11, 1
    %s17 = ssub.s32 %s11, 2
    %s27 = sadd.s32 1, %s20
    %p28 = scmp.ge.s32.totalorder %s27, 2
    %s29 = scalar_select %p28, 0, %s27
    %s30 = sadd.s32 1, %s19
    %s31 = scalar_select %p28, %s30, %s19
    %p32 = scmp.ge.s32.totalorder %s31, 2
    %s33 = scalar_select %p32, 0, %s31
    %s34 = sadd.s32 1, %s18
    %s35 = scalar_select %p32, %s34, %s18
    %p36 = scmp.ge.s32.totalorder %s35, 2
    %s37 = scalar_select %p36, 0, %s35
    %s38 = ssub.s32 %s18, %s37
    %p39 = scmp.eq.s32.totalorder %s38, 0
    %s41 = sadd.s32 %s40, 1
    %s42 = scalar_select %p39, %s40, %s41
    %p45 = pneg %p39
    %p46 = scmp.eq.s32.totalorder %s11, 7
    %p47 = por %p45, %p46
    %p48 = scmp.ne.s32.totalorder %s40, %s43
    %p49 = scmp.eq.s32.totalorder %s11, 0
    %p50 = por %p48, %p49
    %p51 = scmp.ne.s32.totalorder %s40, %s43
    %p52 = scmp.eq.s32.totalorder %s16, 7
    %p53 = por %p51, %p52
    %p54 = scmp.ne.s32.totalorder %s43, %s44
    %p55 = scmp.eq.s32.totalorder %s16, 0
    %p56 = por %p54, %p55
    %p57 = scmp.ne.s32.totalorder %s43, %s44
    %p58 = scmp.eq.s32.totalorder %s17, 7
    %p59 = por %p57, %p58
    %p61 = scmp.ne.s32.totalorder %s44, %s60
    %p62 = scmp.eq.s32.totalorder %s17, 0
    %p63 = por %p61, %p62
    %s65 = sadd.s32 %s64, 1
    %p68 = scmp.eq.s32.totalorder %s11, 7
    %p69 = scmp.ne.s32.totalorder %s64, %s66
    %p70 = scmp.eq.s32.totalorder %s11, 0
    %p71 = por %p69, %p70
    %p72 = scmp.ne.s32.totalorder %s64, %s66
    %p73 = scmp.eq.s32.totalorder %s16, 7
    %p74 = por %p72, %p73
    %p75 = scmp.ne.s32.totalorder %s66, %s67
    %p76 = scmp.eq.s32.totalorder %s16, 0
    %p77 = por %p75, %p76
    %p78 = scmp.ne.s32.totalorder %s66, %s67
    %p79 = scmp.eq.s32.totalorder %s17, 7
    %p80 = por %p78, %p79
    %p82 = scmp.ne.s32.totalorder %s67, %s81
    %p83 = scmp.eq.s32.totalorder %s17, 0
    %p84 = por %p82, %p83
    %s86 = sadd.s32 %s85, 1
    %p89 = scmp.eq.s32.totalorder %s11, 7
    %p90 = scmp.ne.s32.totalorder %s85, %s87
    %p91 = scmp.eq.s32.totalorder %s11, 0
    %p92 = por %p90, %p91
    %p93 = scmp.ne.s32.totalorder %s85, %s87
    %p94 = scmp.eq.s32.totalorder %s16, 7
    %p95 = por %p93, %p94
    %p96 = scmp.ne.s32.totalorder %s87, %s88
    %p97 = scmp.eq.s32.totalorder %s16, 0
    %p98 = por %p96, %p97
    %p99 = scmp.ne.s32.totalorder %s87, %s88
    %p100 = scmp.eq.s32.totalorder %s17, 7
    %p101 = por %p99, %p100
    %p103 = scmp.ne.s32.totalorder %s88, %s102
    %p104 = scmp.eq.s32.totalorder %s17, 0
    %p105 = por %p103, %p104
    %s107 = sadd.s32 %s106, 1
    %p110 = scmp.eq.s32.totalorder %s11, 7
    %p111 = scmp.ne.s32.totalorder %s106, %s108
    %p112 = scmp.eq.s32.totalorder %s11, 0
    %p113 = por %p111, %p112
    %p114 = scmp.ne.s32.totalorder %s106, %s108
    %p115 = scmp.eq.s32.totalorder %s16, 7
    %p116 = por %p114, %p115
    %p117 = scmp.ne.s32.totalorder %s108, %s109
    %p118 = scmp.eq.s32.totalorder %s16, 0
    %p119 = por %p117, %p118
    %p120 = scmp.ne.s32.totalorder %s108, %s109
    %p121 = scmp.eq.s32.totalorder %s17, 7
    %p122 = por %p120, %p121
    %p124 = scmp.ne.s32.totalorder %s109, %s123
    %p125 = scmp.eq.s32.totalorder %s17, 0
    %p126 = por %p124, %p125
    %s128 = sadd.s32 %s127, 1
    %p131 = scmp.eq.s32.totalorder %s11, 7
    %p132 = scmp.ne.s32.totalorder %s127, %s129
    %p133 = scmp.eq.s32.totalorder %s11, 0
    %p134 = por %p132, %p133
    %p135 = scmp.ne.s32.totalorder %s127, %s129
    %p136 = scmp.eq.s32.totalorder %s16, 7
    %p137 = por %p135, %p136
    %p138 = scmp.ne.s32.totalorder %s129, %s130
    %p139 = scmp.eq.s32.totalorder %s16, 0
    %p140 = por %p138, %p139
    %p141 = scmp.ne.s32.totalorder %s129, %s130
    %p142 = scmp.eq.s32.totalorder %s17, 7
    %p143 = por %p141, %p142
    %p145 = scmp.ne.s32.totalorder %s130, %s144
    %p146 = scmp.eq.s32.totalorder %s17, 0
    %p147 = por %p145, %p146
    %s148 = ssub.s32 %s18, %s37
    %s149 = ssub.s32 %s19, %s33
    %s150 = sor.u32 %s148, %s149
    %p151 = scmp.eq.s32.totalorder %s150, 0
    %s153 = sadd.s32 %s152, 1
    %s154 = scalar_select %p151, %s152, %s153
    %p157 = pneg %p151
    %p158 = scmp.eq.s32.totalorder %s11, 7
    %p159 = por %p157, %p158
    %p160 = scmp.ne.s32.totalorder %s152, %s155
    %p161 = scmp.eq.s32.totalorder %s11, 0
    %p162 = por %p160, %p161
    %p163 = scmp.ne.s32.totalorder %s152, %s155
    %p164 = scmp.eq.s32.totalorder %s16, 7
    %p165 = por %p163, %p164
    %p166 = scmp.ne.s32.totalorder %s155, %s156
    %p167 = scmp.eq.s32.totalorder %s16, 0
    %p168 = por %p166, %p167
    %p169 = scmp.ne.s32.totalorder %s155, %s156
    %p170 = scmp.eq.s32.totalorder %s17, 7
    %p171 = por %p169, %p170
    %p173 = scmp.ne.s32.totalorder %s156, %s172
    %p174 = scmp.eq.s32.totalorder %s17, 0
    %p175 = por %p173, %p174
    %p176 = scmp.le.s32.totalorder 1, %s11
    %p177 = scmp.lt.s32.totalorder %s11, 9
    %p178 = pnand %p176, %p177
    %p179 = pneg %p178
    // Predicated region
    $region9: #{attention_forward.1} parent=5 // pred_check
      _
    $region10: #{attention_forward.1} parent=5 // pred_check_branch
      %181 = sbr.rel (%p178) target = $region12
    $region11: #{attention_forward.1} parent=5 // pred_region
      %s182 = ssub.s32 %s11, 1
      // Predicated region
      $region13: #{attention_forward.1} parent=11 // pred_check
        %p183 = pneg %p77
      $region14: #{attention_forward.1} parent=11 // pred_check_branch
        %185 = sbr.rel (%p183) target = $region16
      $region15: #{attention_forward.1} parent=11 // pred_region
        _
      $region16: #{attention_forward.1} parent=11 // pred_fallthru
        _
      // Predicated region
      $region17: #{attention_forward.1} parent=11 // pred_check
        %p186 = pneg %p98
      $region18: #{attention_forward.1} parent=11 // pred_check_branch
        %188 = sbr.rel (%p186) target = $region20
      $region19: #{attention_forward.1} parent=11 // pred_region
        _
      $region20: #{attention_forward.1} parent=11 // pred_fallthru
        _
      // Predicated region
      $region21: #{attention_forward.1} parent=11 // pred_check
        %p189 = pneg %p119
      $region22: #{attention_forward.1} parent=11 // pred_check_branch
        %191 = sbr.rel (%p189) target = $region24
      $region23: #{attention_forward.1} parent=11 // pred_region
        _
      $region24: #{attention_forward.1} parent=11 // pred_fallthru
        _
      // Predicated region
      $region25: #{attention_forward.1} parent=11 // pred_check
        %p192 = pneg %p140
      $region26: #{attention_forward.1} parent=11 // pred_check_branch
        %194 = sbr.rel (%p192) target = $region28
      $region27: #{attention_forward.1} parent=11 // pred_region
        _
      $region28: #{attention_forward.1} parent=11 // pred_fallthru
        _
    $region12: #{attention_forward.1} parent=5 // pred_fallthru
      _
    %p195 = scmp.lt.s32.totalorder %s11, 8
    // Predicated region
    $region29: #{attention_forward.1} parent=5 // pred_check
      %p196 = pneg %p195
    $region30: #{attention_forward.1} parent=5 // pred_check_branch
      %198 = sbr.rel (%p196) target = $region32
    $region31: #{attention_forward.1} parent=5 // pred_region
      // Predicated region
      $region33: #{attention_forward.1} parent=31 // pred_check
        %p199 = pneg %p50
      $region34: #{attention_forward.1} parent=31 // pred_check_branch
        %201 = sbr.rel (%p199) target = $region36
      $region35: #{attention_forward.1} parent=31 // pred_region
        %p202 = scmp.lt.s32.totalorder %s18, 1
        %s203 = scalar_select %p202, %s18, 1
        %s204 = smul.addr %s203, 32
        %s205 = smul.addr %s204, 4
        %s206 = scalar_lea.vmem %s0, %s205
      $region36: #{attention_forward.1} parent=31 // pred_fallthru
        _
    $region32: #{attention_forward.1} parent=5 // pred_fallthru
      _
    %p207 = scmp.le.s32.totalorder 1, %s11
    %p208 = scmp.lt.s32.totalorder %s11, 9
    %p209 = pnand %p207, %p208
    %p210 = pneg %p209
    // Predicated region
    $region37: #{attention_forward.1} parent=5 // pred_check
      _
    $region38: #{attention_forward.1} parent=5 // pred_check_branch
      %212 = sbr.rel (%p209) target = $region40
    $region39: #{attention_forward.1} parent=5 // pred_region
      %s213 = ssub.s32 %s11, 1
      %p214 = scmp.lt.s32.totalorder %s21, 1
      %s215 = scalar_select %p214, %s21, 1
      %s216 = smul.addr %s215, 32
      %s217 = smul.addr %s216, 4
      %s218 = scalar_lea.vmem %s0, %s217
      %p219 = pneg %p56
      %p220 = pneg %p53
      %p221 = pneg %p77
      %p222 = pneg %p74
      %p223 = pneg %p98
      %p224 = pneg %p95
      %p225 = pneg %p119
      %p226 = pneg %p116
      %p227 = pneg %p140
      %p228 = pneg %p137
      %p229 = pneg %p168
      %p230 = pneg %p165
      %s231 = smul.u32 16, %s22
      %p232 = scmp.lt.s32.totalorder %s21, 1
      %s233 = scalar_select %p232, %s21, 1
      %p234 = scmp.lt.s32.totalorder %s231, 31
      %s235 = scalar_select %p234, %s231, 31
      %s236 = smul.addr %s233, 32
      %s237 = sadd.s32 %s235, %s236
      %s238 = smul.addr %s237, 8
      %s239 = scalar_lea.vmem %s5, %s238
      %p240 = scmp.lt.s32.totalorder %s21, 1
      %s241 = scalar_select %p240, %s21, 1
      %s242 = smul.addr %s241, 32
      %s243 = smul.addr %s242, 4
      %s244 = scalar_lea.vmem %s0, %s243
      %s245 = smul.u32 16, %s22
      %p246 = scmp.lt.s32.totalorder %s21, 1
      %s247 = scalar_select %p246, %s21, 1
      %p248 = scmp.lt.s32.totalorder %s245, 31
      %s249 = scalar_select %p248, %s245, 31
      %s250 = smul.addr %s247, 32
      %s251 = sadd.s32 %s249, %s250
      %s252 = smul.addr %s251, 8
      %s253 = scalar_lea.vmem %s5, %s252
      %s254 = smul.u32 16, %s22
      %p256 = scmp.eq.s32.totalorder %s23, 0
      // Predicated region
      $region41: #{attention_forward.1} parent=39 // pred_check
        %p257 = pneg %p256
      $region42: #{attention_forward.1} parent=39 // pred_check_branch
        %259 = sbr.rel (%p257) target = $region44
      $region43: #{attention_forward.1} parent=39 // pred_region
        %s260 = smul.u32 %s22, 128
        %s261 = sshra.s32 %s260, 3
        %s262 = sand.u32 %s260, 7
        %s263 = smul.addr %s261, 4
        %s264 = scalar_lea.vmem %s244, %s263
        %v265 = vld [vmem:[%s264] sm:$0xf]
        %v266 = vld [vmem:[%s264 + $0x4] sm:$0xf]
        %v267 = vld [vmem:[%s264 + $0x8] sm:$0xf]
        %v268 = vld [vmem:[%s264 + $0xc] sm:$0xf]
        %v269 = vld [vmem:[%s264 + $0x10] sm:$0xf]
        %v270 = vld [vmem:[%s264 + $0x14] sm:$0xf]
        %v271 = vld [vmem:[%s264 + $0x18] sm:$0xf]
        %v272 = vld [vmem:[%s264 + $0x1c] sm:$0xf]
        %v273 = vld [vmem:[%s264 + $0x20] sm:$0xf]
        %v274 = vld [vmem:[%s264 + $0x24] sm:$0xf]
        %v275 = vld [vmem:[%s264 + $0x28] sm:$0xf]
        %v276 = vld [vmem:[%s264 + $0x2c] sm:$0xf]
        %v277 = vld [vmem:[%s264 + $0x30] sm:$0xf]
        %v278 = vld [vmem:[%s264 + $0x34] sm:$0xf]
        %v279 = vld [vmem:[%s264 + $0x38] sm:$0xf]
        %v280 = vld [vmem:[%s264 + $0x3c] sm:$0xf]
        %v281 = vld [vmem:[%s1] sm:$0xf]
        %v282 = vld [vmem:[%s1 + $0x4] sm:$0xf]
        %v283 = vld [vmem:[%s1 + $0x8] sm:$0xf]
        %v284 = vld [vmem:[%s1 + $0xc] sm:$0xf]
        %v285 = vld [vmem:[%s1 + $0x10] sm:$0xf]
        %v286 = vld [vmem:[%s1 + $0x14] sm:$0xf]
        %v287 = vld [vmem:[%s1 + $0x18] sm:$0xf]
        %v288 = vld [vmem:[%s1 + $0x1c] sm:$0xf]
        %v289 = vld [vmem:[%s1 + $0x20] sm:$0xf]
        %v290 = vld [vmem:[%s1 + $0x24] sm:$0xf]
        %v291 = vld [vmem:[%s1 + $0x28] sm:$0xf]
        %v292 = vld [vmem:[%s1 + $0x2c] sm:$0xf]
        %v293 = vld [vmem:[%s1 + $0x30] sm:$0xf]
        %v294 = vld [vmem:[%s1 + $0x34] sm:$0xf]
        %v295 = vld [vmem:[%s1 + $0x38] sm:$0xf]
        %v296 = vld [vmem:[%s1 + $0x3c] sm:$0xf]
        %v297 = vld [vmem:[%s3] sm:$0x1]
        %v299 = vlaneseq
        %v300 = vshrl.u32 %v299, 7
        %v301 = vsub.s32 0, %v300
        %v302 = vrot.slane %v297, %v301
        %v320 = vunpack.c.l.b16 %v265
        %v321 = vunpack.c.l.b16 %v266
        %v322 = vunpack.c.l.b16 %v267
        %v323 = vunpack.c.l.b16 %v268
        %v324 = vunpack.c.l.b16 %v269
        %v325 = vunpack.c.l.b16 %v270
        %v326 = vunpack.c.l.b16 %v271
        %v327 = vunpack.c.l.b16 %v272
        %v328 = vunpack.c.l.b16 %v273
        %v329 = vunpack.c.l.b16 %v274
        %v330 = vunpack.c.l.b16 %v275
        %v331 = vunpack.c.l.b16 %v276
        %v332 = vunpack.c.l.b16 %v277
        %v333 = vunpack.c.l.b16 %v278
        %v334 = vunpack.c.l.b16 %v279
        %v335 = vunpack.c.l.b16 %v280
        %v336 = vpack.c.b16 %v321, %v320
        %v337 = vpack.c.b16 %v323, %v322
        %v338 = vpack.c.b16 %v325, %v324
        %v339 = vpack.c.b16 %v327, %v326
        %v340 = vpack.c.b16 %v329, %v328
        %v341 = vpack.c.b16 %v331, %v330
        %v342 = vpack.c.b16 %v333, %v332
        %v343 = vpack.c.b16 %v335, %v334
        %v368 = vunpack.c.l.b16 %v281
        %v369 = vunpack.c.l.b16 %v282
        %v370 = vunpack.c.l.b16 %v283
        %v371 = vunpack.c.l.b16 %v284
        %v372 = vunpack.c.l.b16 %v285
        %v373 = vunpack.c.l.b16 %v286
        %v374 = vunpack.c.l.b16 %v287
        %v375 = vunpack.c.l.b16 %v288
        %v376 = vunpack.c.l.b16 %v289
        %v377 = vunpack.c.l.b16 %v290
        %v378 = vunpack.c.l.b16 %v291
        %v379 = vunpack.c.l.b16 %v292
        %v380 = vunpack.c.l.b16 %v293
        %v381 = vunpack.c.l.b16 %v294
        %v382 = vunpack.c.l.b16 %v295
        %v383 = vunpack.c.l.b16 %v296
        %v384 = vpack.c.b16 %v369, %v368
        %v385 = vpack.c.b16 %v371, %v370
        %v386 = vpack.c.b16 %v373, %v372
        %v387 = vpack.c.b16 %v375, %v374
        %v388 = vpack.c.b16 %v377, %v376
        %v389 = vpack.c.b16 %v379, %v378
        %v390 = vpack.c.b16 %v381, %v380
        %v391 = vpack.c.b16 %v383, %v382
        %400 = vmatprep.subr.bf16.mxu0 0
        %401 = vmatpush1.bf16.msra.mxu0 %v391
        %402 = vmatprep.subr.bf16.mxu0 0
        %403 = vmatpush1.bf16.msra.mxu0 %v390
        %404 = vmatprep.subr.bf16.mxu0 0
        %405 = vmatpush1.bf16.msra.mxu0 %v389
        %406 = vmatprep.subr.bf16.mxu0 0
        %407 = vmatpush1.bf16.msra.mxu0 %v388
        %408 = vmatprep.subr.bf16.mxu0 0
        %409 = vmatpush1.bf16.msra.mxu0 %v387
        %410 = vmatprep.subr.bf16.mxu0 0
        %411 = vmatpush1.bf16.msra.mxu0 %v386
        %412 = vmatprep.subr.bf16.mxu0 0
        %413 = vmatpush1.bf16.msra.mxu0 %v385
        %414 = vmatprep.subr.bf16.mxu0 0
        %415 = vmatpush1.bf16.msra.mxu0 %v384
        %416 = vmatprep.subr.bf16.mxu0 0
        %417 = vmatpush2.bf16.msra.mxu0 0
        %418 = vmatprep.subr.bf16.mxu0 0
        %419 = vmatpush2.bf16.msra.mxu0 0
        %420 = vmatprep.subr.bf16.mxu0 0
        %421 = vmatpush2.bf16.msra.mxu0 0
        %422 = vmatprep.subr.bf16.mxu0 0
        %423 = vmatpush2.bf16.msra.mxu0 0
        %424 = vmatprep.subr.bf16.mxu0 0
        %425 = vmatpush2.bf16.msra.mxu0 0
        %426 = vmatprep.subr.bf16.mxu0 0
        %427 = vmatpush2.bf16.msra.mxu0 0
        %428 = vmatprep.subr.bf16.mxu0 0
        %429 = vmatpush2.bf16.msra.mxu0 0
        %430 = vmatprep.subr.bf16.mxu0 0
        %431 = vmatpush2.bf16.msra.mxu0 0
        %432 = vmatprep.mubr.bf16.mxu0 0
        %433 = vmatmul.mubr.bf16.gmra.mxu0 %v336
        %v434 = vpop.f32.mrf.mxu0
        %v435 = vadd.f32 %v302, %v434
        %v436 = vpop.f32.mrf.mxu0
        %v437 = vpop.f32.mrf.mxu0
        %v438 = vadd.f32 %v302, %v437
        %v439 = vpop.f32.mrf.mxu0
        %440 = vmatprep.mubr.bf16.mxu0 0
        %441 = vmatmul.mubr.bf16.gmra.mxu0 %v337
        %v442 = vpop.f32.mrf.mxu0
        %v443 = vadd.f32 %v302, %v442
        %v444 = vpop.f32.mrf.mxu0
        %v445 = vpop.f32.mrf.mxu0
        %v446 = vadd.f32 %v302, %v445
        %v447 = vpop.f32.mrf.mxu0
        %448 = vmatprep.mubr.bf16.mxu0 0
        %449 = vmatmul.mubr.bf16.gmra.mxu0 %v338
        %v450 = vpop.f32.mrf.mxu0
        %v451 = vadd.f32 %v302, %v450
        %v452 = vpop.f32.mrf.mxu0
        %v453 = vpop.f32.mrf.mxu0
        %v454 = vadd.f32 %v302, %v453
        %v455 = vpop.f32.mrf.mxu0
        %456 = vmatprep.mubr.bf16.mxu0 0
        %457 = vmatmul.mubr.bf16.gmra.mxu0 %v339
        %v458 = vpop.f32.mrf.mxu0
        %v459 = vadd.f32 %v302, %v458
        %v460 = vpop.f32.mrf.mxu0
        %v461 = vpop.f32.mrf.mxu0
        %v462 = vadd.f32 %v302, %v461
        %v463 = vpop.f32.mrf.mxu0
        %464 = vmatprep.mubr.bf16.mxu0 0
        %465 = vmatmul.mubr.bf16.gmra.mxu0 %v340
        %v466 = vpop.f32.mrf.mxu0
        %v467 = vadd.f32 %v302, %v466
        %v468 = vpop.f32.mrf.mxu0
        %v469 = vpop.f32.mrf.mxu0
        %v470 = vadd.f32 %v302, %v469
        %v471 = vpop.f32.mrf.mxu0
        %472 = vmatprep.mubr.bf16.mxu0 0
        %473 = vmatmul.mubr.bf16.gmra.mxu0 %v341
        %v474 = vpop.f32.mrf.mxu0
        %v475 = vadd.f32 %v302, %v474
        %v476 = vpop.f32.mrf.mxu0
        %v477 = vpop.f32.mrf.mxu0
        %v478 = vadd.f32 %v302, %v477
        %v479 = vpop.f32.mrf.mxu0
        %480 = vmatprep.mubr.bf16.mxu0 0
        %481 = vmatmul.mubr.bf16.gmra.mxu0 %v342
        %v482 = vpop.f32.mrf.mxu0
        %v483 = vadd.f32 %v302, %v482
        %v484 = vpop.f32.mrf.mxu0
        %v485 = vpop.f32.mrf.mxu0
        %v486 = vadd.f32 %v302, %v485
        %v487 = vpop.f32.mrf.mxu0
        %488 = vmatprep.mubr.bf16.mxu0 0
        %489 = vmatmul.mubr.bf16.gmra.mxu0 %v343
        %v490 = vpop.f32.mrf.mxu0
        %v491 = vadd.f32 %v302, %v490
        %v492 = vpop.f32.mrf.mxu0
        %v493 = vpop.f32.mrf.mxu0
        %v494 = vadd.f32 %v302, %v493
        %v495 = vpop.f32.mrf.mxu0
        %496 = vdwg.mxu0
        %v497 = vmul.f32 %v435, 0.088388346
        %v498 = vmul.f32 %v438, 0.088388346
        %v499 = vmul.f32 %v443, 0.088388346
        %v500 = vmul.f32 %v446, 0.088388346
        %v501 = vmul.f32 %v451, 0.088388346
        %v502 = vmul.f32 %v454, 0.088388346
        %v503 = vmul.f32 %v459, 0.088388346
        %v504 = vmul.f32 %v462, 0.088388346
        %v505 = vmul.f32 %v467, 0.088388346
        %v506 = vmul.f32 %v470, 0.088388346
        %v507 = vmul.f32 %v475, 0.088388346
        %v508 = vmul.f32 %v478, 0.088388346
        %v509 = vmul.f32 %v483, 0.088388346
        %v510 = vmul.f32 %v486, 0.088388346
        %v511 = vmul.f32 %v491, 0.088388346
        %v512 = vmul.f32 %v494, 0.088388346
        %v513 = vpack.c.bf16 %v498, %v497
        %v514 = vpack.c.bf16 %v500, %v499
        %v515 = vpack.c.bf16 %v502, %v501
        %v516 = vpack.c.bf16 %v504, %v503
        %v517 = vpack.c.bf16 %v506, %v505
        %v518 = vpack.c.bf16 %v508, %v507
        %v519 = vpack.c.bf16 %v510, %v509
        %v520 = vpack.c.bf16 %v512, %v511
        %v529 = vunpack.c.l.b16 %v513
        %v530 = vunpack.c.h.b16 %v513
        %v531 = vunpack.c.l.b16 %v514
        %v532 = vunpack.c.h.b16 %v514
        %v533 = vunpack.c.l.b16 %v515
        %v534 = vunpack.c.h.b16 %v515
        %v535 = vunpack.c.l.b16 %v516
        %v536 = vunpack.c.h.b16 %v516
        %v537 = vunpack.c.l.b16 %v517
        %v538 = vunpack.c.h.b16 %v517
        %v539 = vunpack.c.l.b16 %v518
        %v540 = vunpack.c.h.b16 %v518
        %v541 = vunpack.c.l.b16 %v519
        %v542 = vunpack.c.h.b16 %v519
        %v543 = vunpack.c.l.b16 %v520
        %v544 = vunpack.c.h.b16 %v520
        %v545 = vpack.c.b16 %v529, %v529
        %v546 = vpack.c.b16 %v530, %v530
        %v547 = vpack.c.b16 %v531, %v531
        %v548 = vpack.c.b16 %v532, %v532
        %v549 = vpack.c.b16 %v533, %v533
        %v550 = vpack.c.b16 %v534, %v534
        %v551 = vpack.c.b16 %v535, %v535
        %v552 = vpack.c.b16 %v536, %v536
        %v553 = vpack.c.b16 %v537, %v537
        %v554 = vpack.c.b16 %v538, %v538
        %v555 = vpack.c.b16 %v539, %v539
        %v556 = vpack.c.b16 %v540, %v540
        %v557 = vpack.c.b16 %v541, %v541
        %v558 = vpack.c.b16 %v542, %v542
        %v559 = vpack.c.b16 %v543, %v543
        %v560 = vpack.c.b16 %v544, %v544
        %577 = vst [vmem:[#allocation2] sm:$0xf] %v545
        %578 = vst [vmem:[#allocation2 + $0x4] sm:$0xf] %v546
        %579 = vst [vmem:[#allocation2 + $0x8] sm:$0xf] %v547
        %580 = vst [vmem:[#allocation2 + $0xc] sm:$0xf] %v548
        %581 = vst [vmem:[#allocation2 + $0x10] sm:$0xf] %v549
        %582 = vst [vmem:[#allocation2 + $0x14] sm:$0xf] %v550
        %583 = vst [vmem:[#allocation2 + $0x18] sm:$0xf] %v551
        %584 = vst [vmem:[#allocation2 + $0x1c] sm:$0xf] %v552
        %585 = vst [vmem:[#allocation2 + $0x20] sm:$0xf] %v553
        %586 = vst [vmem:[#allocation2 + $0x24] sm:$0xf] %v554
        %587 = vst [vmem:[#allocation2 + $0x28] sm:$0xf] %v555
        %588 = vst [vmem:[#allocation2 + $0x2c] sm:$0xf] %v556
        %589 = vst [vmem:[#allocation2 + $0x30] sm:$0xf] %v557
        %590 = vst [vmem:[#allocation2 + $0x34] sm:$0xf] %v558
        %591 = vst [vmem:[#allocation2 + $0x38] sm:$0xf] %v559
        %592 = vst [vmem:[#allocation2 + $0x3c] sm:$0xf] %v560
        %vm593 = vcmask 7168
        %594 = vst.msk [vmem:[#allocation3] sm:$0xff] %vm593, -inf
        %595 = vst.msk [vmem:[#allocation3 + $0x8] sm:$0xff] %vm593, -inf
        %596 = vst.msk [vmem:[#allocation3 + $0x10] sm:$0xff] %vm593, -inf
        %597 = vst.msk [vmem:[#allocation3 + $0x18] sm:$0xff] %vm593, -inf
        %598 = vst.msk [vmem:[#allocation3 + $0x20] sm:$0xff] %vm593, -inf
        %599 = vst.msk [vmem:[#allocation3 + $0x28] sm:$0xff] %vm593, -inf
        %600 = vst.msk [vmem:[#allocation3 + $0x30] sm:$0xff] %vm593, -inf
        %601 = vst.msk [vmem:[#allocation3 + $0x38] sm:$0xff] %vm593, -inf
        %602 = vst.msk [vmem:[#allocation3 + $0x40] sm:$0xff] %vm593, -inf
        %603 = vst.msk [vmem:[#allocation3 + $0x48] sm:$0xff] %vm593, -inf
        %604 = vst.msk [vmem:[#allocation3 + $0x50] sm:$0xff] %vm593, -inf
        %605 = vst.msk [vmem:[#allocation3 + $0x58] sm:$0xff] %vm593, -inf
        %606 = vst.msk [vmem:[#allocation3 + $0x60] sm:$0xff] %vm593, -inf
        %607 = vst.msk [vmem:[#allocation3 + $0x68] sm:$0xff] %vm593, -inf
        %608 = vst.msk [vmem:[#allocation3 + $0x70] sm:$0xff] %vm593, -inf
        %609 = vst.msk [vmem:[#allocation3 + $0x78] sm:$0xff] %vm593, -inf
        %610 = vst.msk [vmem:[#allocation4] sm:$0xff] %vm593, 0.0
        %611 = vst.msk [vmem:[#allocation4 + $0x8] sm:$0xff] %vm593, 0.0
        %612 = vst.msk [vmem:[#allocation4 + $0x10] sm:$0xff] %vm593, 0.0
        %613 = vst.msk [vmem:[#allocation4 + $0x18] sm:$0xff] %vm593, 0.0
        %614 = vst.msk [vmem:[#allocation4 + $0x20] sm:$0xff] %vm593, 0.0
        %615 = vst.msk [vmem:[#allocation4 + $0x28] sm:$0xff] %vm593, 0.0
        %616 = vst.msk [vmem:[#allocation4 + $0x30] sm:$0xff] %vm593, 0.0
        %617 = vst.msk [vmem:[#allocation4 + $0x38] sm:$0xff] %vm593, 0.0
        %618 = vst.msk [vmem:[#allocation4 + $0x40] sm:$0xff] %vm593, 0.0
        %619 = vst.msk [vmem:[#allocation4 + $0x48] sm:$0xff] %vm593, 0.0
        %620 = vst.msk [vmem:[#allocation4 + $0x50] sm:$0xff] %vm593, 0.0
        %621 = vst.msk [vmem:[#allocation4 + $0x58] sm:$0xff] %vm593, 0.0
        %622 = vst.msk [vmem:[#allocation4 + $0x60] sm:$0xff] %vm593, 0.0
        %623 = vst.msk [vmem:[#allocation4 + $0x68] sm:$0xff] %vm593, 0.0
        %624 = vst.msk [vmem:[#allocation4 + $0x70] sm:$0xff] %vm593, 0.0
        %625 = vst.msk [vmem:[#allocation4 + $0x78] sm:$0xff] %vm593, 0.0
        %626 = vst [vmem:[#allocation5] sm:$0xff] 0.0
        %627 = vst [vmem:[#allocation5 + $0x8] sm:$0xff] 0.0
        %628 = vst [vmem:[#allocation5 + $0x10] sm:$0xff] 0.0
        %629 = vst [vmem:[#allocation5 + $0x18] sm:$0xff] 0.0
        %630 = vst [vmem:[#allocation5 + $0x20] sm:$0xff] 0.0
        %631 = vst [vmem:[#allocation5 + $0x28] sm:$0xff] 0.0
        %632 = vst [vmem:[#allocation5 + $0x30] sm:$0xff] 0.0
        %633 = vst [vmem:[#allocation5 + $0x38] sm:$0xff] 0.0
        %634 = vst [vmem:[#allocation5 + $0x40] sm:$0xff] 0.0
        %635 = vst [vmem:[#allocation5 + $0x48] sm:$0xff] 0.0
        %636 = vst [vmem:[#allocation5 + $0x50] sm:$0xff] 0.0
        %637 = vst [vmem:[#allocation5 + $0x58] sm:$0xff] 0.0
        %638 = vst [vmem:[#allocation5 + $0x60] sm:$0xff] 0.0
        %639 = vst [vmem:[#allocation5 + $0x68] sm:$0xff] 0.0
        %640 = vst [vmem:[#allocation5 + $0x70] sm:$0xff] 0.0
        %641 = vst [vmem:[#allocation5 + $0x78] sm:$0xff] 0.0
      $region44: #{attention_forward.1} parent=39 // pred_fallthru
        _
      %s642 = smul.u32 %s23, 128
      %s643 = sshra.s32 %s642, 3
      %s644 = sand.u32 %s642, 7
      %s645 = smul.addr %s643, 4
      %s646 = scalar_lea.vmem %s244, %s645
      %v647 = vld [vmem:[%s646] sm:$0xf]
      %v648 = vld [vmem:[%s646 + $0x4] sm:$0xf]
      %v649 = vld [vmem:[%s646 + $0x8] sm:$0xf]
      %v650 = vld [vmem:[%s646 + $0xc] sm:$0xf]
      %v651 = vld [vmem:[%s646 + $0x10] sm:$0xf]
      %v652 = vld [vmem:[%s646 + $0x14] sm:$0xf]
      %v653 = vld [vmem:[%s646 + $0x18] sm:$0xf]
      %v654 = vld [vmem:[%s646 + $0x1c] sm:$0xf]
      %v655 = vld [vmem:[%s646 + $0x20] sm:$0xf]
      %v656 = vld [vmem:[%s646 + $0x24] sm:$0xf]
      %v657 = vld [vmem:[%s646 + $0x28] sm:$0xf]
      %v658 = vld [vmem:[%s646 + $0x2c] sm:$0xf]
      %v659 = vld [vmem:[%s646 + $0x30] sm:$0xf]
      %v660 = vld [vmem:[%s646 + $0x34] sm:$0xf]
      %v661 = vld [vmem:[%s646 + $0x38] sm:$0xf]
      %v662 = vld [vmem:[%s646 + $0x3c] sm:$0xf]
      %v663 = vld [vmem:[%s2] sm:$0xff]
      %v664 = vld [vmem:[%s2 + $0x8] sm:$0xff]
      %v665 = vld [vmem:[%s2 + $0x10] sm:$0xff]
      %v666 = vld [vmem:[%s2 + $0x18] sm:$0xff]
      %v667 = vld [vmem:[%s2 + $0x20] sm:$0xff]
      %v668 = vld [vmem:[%s2 + $0x28] sm:$0xff]
      %v669 = vld [vmem:[%s2 + $0x30] sm:$0xff]
      %v670 = vld [vmem:[%s2 + $0x38] sm:$0xff]
      %v671 = vld [vmem:[%s2 + $0x40] sm:$0xff]
      %v672 = vld [vmem:[%s2 + $0x48] sm:$0xff]
      %v673 = vld [vmem:[%s2 + $0x50] sm:$0xff]
      %v674 = vld [vmem:[%s2 + $0x58] sm:$0xff]
      %v675 = vld [vmem:[%s2 + $0x60] sm:$0xff]
      %v676 = vld [vmem:[%s2 + $0x68] sm:$0xff]
      %v677 = vld [vmem:[%s2 + $0x70] sm:$0xff]
      %v678 = vld [vmem:[%s2 + $0x78] sm:$0xff]
      %v679 = vld [vmem:[%s4] sm:$0x3]
      %v681 = vlaneseq
      %v682 = vshrl.u32 %v681, 7
      %v683 = vsub.s32 0, %v682
      %v684 = vrot.slane %v679, %v683
      %v685 = vlaneseq
      %v686 = vshrl.u32 %v685, 7
      %v687 = vsub.s32 1, %v686
      %v688 = vrot.slane %v679, %v687
      %v707 = vunpack.c.l.b16 %v647
      %v708 = vunpack.c.l.b16 %v648
      %v709 = vunpack.c.l.b16 %v649
      %v710 = vunpack.c.l.b16 %v650
      %v711 = vunpack.c.l.b16 %v651
      %v712 = vunpack.c.l.b16 %v652
      %v713 = vunpack.c.l.b16 %v653
      %v714 = vunpack.c.l.b16 %v654
      %v715 = vunpack.c.l.b16 %v655
      %v716 = vunpack.c.l.b16 %v656
      %v717 = vunpack.c.l.b16 %v657
      %v718 = vunpack.c.l.b16 %v658
      %v719 = vunpack.c.l.b16 %v659
      %v720 = vunpack.c.l.b16 %v660
      %v721 = vunpack.c.l.b16 %v661
      %v722 = vunpack.c.l.b16 %v662
      %v723 = vpack.c.b16 %v708, %v707
      %v724 = vpack.c.b16 %v710, %v709
      %v725 = vpack.c.b16 %v712, %v711
      %v726 = vpack.c.b16 %v714, %v713
      %v727 = vpack.c.b16 %v716, %v715
      %v728 = vpack.c.b16 %v718, %v717
      %v729 = vpack.c.b16 %v720, %v719
      %v730 = vpack.c.b16 %v722, %v721
      %v755 = vunpack.c.l.b16 %v663
      %v756 = vunpack.c.h.b16 %v663
      %v757 = vunpack.c.l.b16 %v664
      %v758 = vunpack.c.h.b16 %v664
      %v759 = vunpack.c.l.b16 %v665
      %v760 = vunpack.c.h.b16 %v665
      %v761 = vunpack.c.l.b16 %v666
      %v762 = vunpack.c.h.b16 %v666
      %v763 = vunpack.c.l.b16 %v667
      %v764 = vunpack.c.h.b16 %v667
      %v765 = vunpack.c.l.b16 %v668
      %v766 = vunpack.c.h.b16 %v668
      %v767 = vunpack.c.l.b16 %v669
      %v768 = vunpack.c.h.b16 %v669
      %v769 = vunpack.c.l.b16 %v670
      %v770 = vunpack.c.h.b16 %v670
      %v771 = vunpack.c.l.b16 %v671
      %v772 = vunpack.c.h.b16 %v671
      %v773 = vunpack.c.l.b16 %v672
      %v774 = vunpack.c.h.b16 %v672
      %v775 = vunpack.c.l.b16 %v673
      %v776 = vunpack.c.h.b16 %v673
      %v777 = vunpack.c.l.b16 %v674
      %v778 = vunpack.c.h.b16 %v674
      %v779 = vunpack.c.l.b16 %v675
      %v780 = vunpack.c.h.b16 %v675
      %v781 = vunpack.c.l.b16 %v676
      %v782 = vunpack.c.h.b16 %v676
      %v783 = vunpack.c.l.b16 %v677
      %v784 = vunpack.c.h.b16 %v677
      %v785 = vunpack.c.l.b16 %v678
      %v786 = vunpack.c.h.b16 %v678
      %v787 = vpack.c.b16 %v757, %v755
      %v788 = vpack.c.b16 %v758, %v756
      %v789 = vpack.c.b16 %v761, %v759
      %v790 = vpack.c.b16 %v762, %v760
      %v791 = vpack.c.b16 %v765, %v763
      %v792 = vpack.c.b16 %v766, %v764
      %v793 = vpack.c.b16 %v769, %v767
      %v794 = vpack.c.b16 %v770, %v768
      %v795 = vpack.c.b16 %v773, %v771
      %v796 = vpack.c.b16 %v774, %v772
      %v797 = vpack.c.b16 %v777, %v775
      %v798 = vpack.c.b16 %v778, %v776
      %v799 = vpack.c.b16 %v781, %v779
      %v800 = vpack.c.b16 %v782, %v780
      %v801 = vpack.c.b16 %v785, %v783
      %v802 = vpack.c.b16 %v786, %v784
      %819 = vmatprep.subr.bf16.mxu0 %v802
      %820 = vmatpush1.bf16.msra.mxu0 %v801
      %821 = vmatprep.subr.bf16.mxu0 %v800
      %822 = vmatpush1.bf16.msra.mxu0 %v799
      %823 = vmatprep.subr.bf16.mxu0 %v798
      %824 = vmatpush1.bf16.msra.mxu0 %v797
      %825 = vmatprep.subr.bf16.mxu0 %v796
      %826 = vmatpush1.bf16.msra.mxu0 %v795
      %827 = vmatprep.subr.bf16.mxu0 %v794
      %828 = vmatpush1.bf16.msra.mxu0 %v793
      %829 = vmatprep.subr.bf16.mxu0 %v792
      %830 = vmatpush1.bf16.msra.mxu0 %v791
      %831 = vmatprep.subr.bf16.mxu0 %v790
      %832 = vmatpush1.bf16.msra.mxu0 %v789
      %833 = vmatprep.subr.bf16.mxu0 %v788
      %834 = vmatpush1.bf16.msra.mxu0 %v787
      %835 = vmatprep.subr.bf16.mxu0 0
      %836 = vmatpush2.bf16.msra.mxu0 0
      %837 = vmatprep.subr.bf16.mxu0 0
      %838 = vmatpush2.bf16.msra.mxu0 0
      %839 = vmatprep.subr.bf16.mxu0 0
      %840 = vmatpush2.bf16.msra.mxu0 0
      %841 = vmatprep.subr.bf16.mxu0 0
      %842 = vmatpush2.bf16.msra.mxu0 0
      %843 = vmatprep.subr.bf16.mxu0 0
      %844 = vmatpush2.bf16.msra.mxu0 0
      %845 = vmatprep.subr.bf16.mxu0 0
      %846 = vmatpush2.bf16.msra.mxu0 0
      %847 = vmatprep.subr.bf16.mxu0 0
      %848 = vmatpush2.bf16.msra.mxu0 0
      %849 = vmatprep.subr.bf16.mxu0 0
      %850 = vmatpush2.bf16.msra.mxu0 0
      %851 = vmatprep.mubr.bf16.mxu0 0
      %852 = vmatmul.mubr.bf16.gmra.mxu0 %v723
      %v853 = vpop.f32.mrf.mxu0
      %v854 = vadd.f32 %v684, %v853
      %v855 = vpop.f32.mrf.mxu0
      %v856 = vadd.f32 %v688, %v855
      %v857 = vpop.f32.mrf.mxu0
      %v858 = vadd.f32 %v684, %v857
      %v859 = vpop.f32.mrf.mxu0
      %v860 = vadd.f32 %v688, %v859
      %861 = vmatprep.mubr.bf16.mxu0 0
      %862 = vmatmul.mubr.bf16.gmra.mxu0 %v724
      %v863 = vpop.f32.mrf.mxu0
      %v864 = vadd.f32 %v684, %v863
      %v865 = vpop.f32.mrf.mxu0
      %v866 = vadd.f32 %v688, %v865
      %v867 = vpop.f32.mrf.mxu0
      %v868 = vadd.f32 %v684, %v867
      %v869 = vpop.f32.mrf.mxu0
      %v870 = vadd.f32 %v688, %v869
      %871 = vmatprep.mubr.bf16.mxu0 0
      %872 = vmatmul.mubr.bf16.gmra.mxu0 %v725
      %v873 = vpop.f32.mrf.mxu0
      %v874 = vadd.f32 %v684, %v873
      %v875 = vpop.f32.mrf.mxu0
      %v876 = vadd.f32 %v688, %v875
      %v877 = vpop.f32.mrf.mxu0
      %v878 = vadd.f32 %v684, %v877
      %v879 = vpop.f32.mrf.mxu0
      %v880 = vadd.f32 %v688, %v879
      %881 = vmatprep.mubr.bf16.mxu0 0
      %882 = vmatmul.mubr.bf16.gmra.mxu0 %v726
      %v883 = vpop.f32.mrf.mxu0
      %v884 = vadd.f32 %v684, %v883
      %v885 = vpop.f32.mrf.mxu0
      %v886 = vadd.f32 %v688, %v885
      %v887 = vpop.f32.mrf.mxu0
      %v888 = vadd.f32 %v684, %v887
      %v889 = vpop.f32.mrf.mxu0
      %v890 = vadd.f32 %v688, %v889
      %891 = vmatprep.mubr.bf16.mxu0 0
      %892 = vmatmul.mubr.bf16.gmra.mxu0 %v727
      %v893 = vpop.f32.mrf.mxu0
      %v894 = vadd.f32 %v684, %v893
      %v895 = vpop.f32.mrf.mxu0
      %v896 = vadd.f32 %v688, %v895
      %v897 = vpop.f32.mrf.mxu0
      %v898 = vadd.f32 %v684, %v897
      %v899 = vpop.f32.mrf.mxu0
      %v900 = vadd.f32 %v688, %v899
      %901 = vmatprep.mubr.bf16.mxu0 0
      %902 = vmatmul.mubr.bf16.gmra.mxu0 %v728
      %v903 = vpop.f32.mrf.mxu0
      %v904 = vadd.f32 %v684, %v903
      %v905 = vpop.f32.mrf.mxu0
      %v906 = vadd.f32 %v688, %v905
      %v907 = vpop.f32.mrf.mxu0
      %v908 = vadd.f32 %v684, %v907
      %v909 = vpop.f32.mrf.mxu0
      %v910 = vadd.f32 %v688, %v909
      %911 = vmatprep.mubr.bf16.mxu0 0
      %912 = vmatmul.mubr.bf16.gmra.mxu0 %v729
      %v913 = vpop.f32.mrf.mxu0
      %v914 = vadd.f32 %v684, %v913
      %v915 = vpop.f32.mrf.mxu0
      %v916 = vadd.f32 %v688, %v915
      %v917 = vpop.f32.mrf.mxu0
      %v918 = vadd.f32 %v684, %v917
      %v919 = vpop.f32.mrf.mxu0
      %v920 = vadd.f32 %v688, %v919
      %921 = vmatprep.mubr.bf16.mxu0 0
      %922 = vmatmul.mubr.bf16.gmra.mxu0 %v730
      %v923 = vpop.f32.mrf.mxu0
      %v924 = vadd.f32 %v684, %v923
      %v925 = vpop.f32.mrf.mxu0
      %v926 = vadd.f32 %v688, %v925
      %v927 = vpop.f32.mrf.mxu0
      %v928 = vadd.f32 %v684, %v927
      %v929 = vpop.f32.mrf.mxu0
      %v930 = vadd.f32 %v688, %v929
      %931 = vdwg.mxu0
      %v932 = vld [vmem:[#allocation2] sm:$0xf]
      %v933 = vld [vmem:[#allocation2 + $0x4] sm:$0xf]
      %v934 = vld [vmem:[#allocation2 + $0x8] sm:$0xf]
      %v935 = vld [vmem:[#allocation2 + $0xc] sm:$0xf]
      %v936 = vld [vmem:[#allocation2 + $0x10] sm:$0xf]
      %v937 = vld [vmem:[#allocation2 + $0x14] sm:$0xf]
      %v938 = vld [vmem:[#allocation2 + $0x18] sm:$0xf]
      %v939 = vld [vmem:[#allocation2 + $0x1c] sm:$0xf]
      %v940 = vld [vmem:[#allocation2 + $0x20] sm:$0xf]
      %v941 = vld [vmem:[#allocation2 + $0x24] sm:$0xf]
      %v942 = vld [vmem:[#allocation2 + $0x28] sm:$0xf]
      %v943 = vld [vmem:[#allocation2 + $0x2c] sm:$0xf]
      %v944 = vld [vmem:[#allocation2 + $0x30] sm:$0xf]
      %v945 = vld [vmem:[#allocation2 + $0x34] sm:$0xf]
      %v946 = vld [vmem:[#allocation2 + $0x38] sm:$0xf]
      %v947 = vld [vmem:[#allocation2 + $0x3c] sm:$0xf]
      %v948 = vpack.c.bf16 %v858, %v854
      %v949 = vpack.c.bf16 %v868, %v864
      %v950 = vpack.c.bf16 %v878, %v874
      %v951 = vpack.c.bf16 %v888, %v884
      %v952 = vpack.c.bf16 %v898, %v894
      %v953 = vpack.c.bf16 %v908, %v904
      %v954 = vpack.c.bf16 %v918, %v914
      %v955 = vpack.c.bf16 %v928, %v924
      %v972 = vunpack.c.l.b16 %v932
      %v973 = vunpack.c.l.b16 %v933
      %v974 = vunpack.c.l.b16 %v934
      %v975 = vunpack.c.l.b16 %v935
      %v976 = vunpack.c.l.b16 %v936
      %v977 = vunpack.c.l.b16 %v937
      %v978 = vunpack.c.l.b16 %v938
      %v979 = vunpack.c.l.b16 %v939
      %v980 = vunpack.c.l.b16 %v940
      %v981 = vunpack.c.l.b16 %v941
      %v982 = vunpack.c.l.b16 %v942
      %v983 = vunpack.c.l.b16 %v943
      %v984 = vunpack.c.l.b16 %v944
      %v985 = vunpack.c.l.b16 %v945
      %v986 = vunpack.c.l.b16 %v946
      %v987 = vunpack.c.l.b16 %v947
      %v988 = vpack.c.b16 %v973, %v972
      %v989 = vpack.c.b16 %v975, %v974
      %v990 = vpack.c.b16 %v977, %v976
      %v991 = vpack.c.b16 %v979, %v978
      %v992 = vpack.c.b16 %v981, %v980
      %v993 = vpack.c.b16 %v983, %v982
      %v994 = vpack.c.b16 %v985, %v984
      %v995 = vpack.c.b16 %v987, %v986
      %1004 = vmatprep.subr.bf16.mxu0 0
      %1005 = vmatpush1.bf16.xpose.msra.mxu0 %v955
      %1006 = vmatprep.subr.bf16.mxu0 0
      %1007 = vmatpush1.bf16.xpose.msra.mxu0 %v954
      %1008 = vmatprep.subr.bf16.mxu0 0
      %1009 = vmatpush1.bf16.xpose.msra.mxu0 %v953
      %1010 = vmatprep.subr.bf16.mxu0 0
      %1011 = vmatpush1.bf16.xpose.msra.mxu0 %v952
      %1012 = vmatprep.subr.bf16.mxu0 0
      %1013 = vmatpush1.bf16.xpose.msra.mxu0 %v951
      %1014 = vmatprep.subr.bf16.mxu0 0
      %1015 = vmatpush1.bf16.xpose.msra.mxu0 %v950
      %1016 = vmatprep.subr.bf16.mxu0 0
      %1017 = vmatpush1.bf16.xpose.msra.mxu0 %v949
      %1018 = vmatprep.subr.bf16.mxu0 0
      %1019 = vmatpush1.bf16.xpose.msra.mxu0 %v948
      %1020 = vmatprep.subr.bf16.mxu0 0
      %1021 = vmatpush2.bf16.xpose.msra.mxu0 0
      %1022 = vmatprep.subr.bf16.mxu0 0
      %1023 = vmatpush2.bf16.xpose.msra.mxu0 0
      %1024 = vmatprep.subr.bf16.mxu0 0
      %1025 = vmatpush2.bf16.xpose.msra.mxu0 0
      %1026 = vmatprep.subr.bf16.mxu0 0
      %1027 = vmatpush2.bf16.xpose.msra.mxu0 0
      %1028 = vmatprep.subr.bf16.mxu0 0
      %1029 = vmatpush2.bf16.xpose.msra.mxu0 0
      %1030 = vmatprep.subr.bf16.mxu0 0
      %1031 = vmatpush2.bf16.xpose.msra.mxu0 0
      %1032 = vmatprep.subr.bf16.mxu0 0
      %1033 = vmatpush2.bf16.xpose.msra.mxu0 0
      %1034 = vmatprep.subr.bf16.mxu0 0
      %1035 = vmatpush2.bf16.xpose.msra.mxu0 0
      %1036 = vmatprep.mubr.bf16.mxu0 0
      %1037 = vmatmul.mubr.bf16.gmra.mxu0 %v988
      %v1038 = vpop.f32.mrf.mxu0
      %v1039 = vadd.f32 0.0, %v1038
      %v1040 = vpop.f32.mrf.mxu0
      %v1041 = vpop.f32.mrf.mxu0
      %v1042 = vadd.f32 0.0, %v1041
      %v1043 = vpop.f32.mrf.mxu0
      %1044 = vmatprep.mubr.bf16.mxu0 0
      %1045 = vmatmul.mubr.bf16.gmra.mxu0 %v989
      %v1046 = vpop.f32.mrf.mxu0
      %v1047 = vadd.f32 0.0, %v1046
      %v1048 = vpop.f32.mrf.mxu0
      %v1049 = vpop.f32.mrf.mxu0
      %v1050 = vadd.f32 0.0, %v1049
      %v1051 = vpop.f32.mrf.mxu0
      %1052 = vmatprep.mubr.bf16.mxu0 0
      %1053 = vmatmul.mubr.bf16.gmra.mxu0 %v990
      %v1054 = vpop.f32.mrf.mxu0
      %v1055 = vadd.f32 0.0, %v1054
      %v1056 = vpop.f32.mrf.mxu0
      %v1057 = vpop.f32.mrf.mxu0
      %v1058 = vadd.f32 0.0, %v1057
      %v1059 = vpop.f32.mrf.mxu0
      %1060 = vmatprep.mubr.bf16.mxu0 0
      %1061 = vmatmul.mubr.bf16.gmra.mxu0 %v991
      %v1062 = vpop.f32.mrf.mxu0
      %v1063 = vadd.f32 0.0, %v1062
      %v1064 = vpop.f32.mrf.mxu0
      %v1065 = vpop.f32.mrf.mxu0
      %v1066 = vadd.f32 0.0, %v1065
      %v1067 = vpop.f32.mrf.mxu0
      %1068 = vmatprep.mubr.bf16.mxu0 0
      %1069 = vmatmul.mubr.bf16.gmra.mxu0 %v992
      %v1070 = vpop.f32.mrf.mxu0
      %v1071 = vadd.f32 0.0, %v1070
      %v1072 = vpop.f32.mrf.mxu0
      %v1073 = vpop.f32.mrf.mxu0
      %v1074 = vadd.f32 0.0, %v1073
      %v1075 = vpop.f32.mrf.mxu0
      %1076 = vmatprep.mubr.bf16.mxu0 0
      %1077 = vmatmul.mubr.bf16.gmra.mxu0 %v993
      %v1078 = vpop.f32.mrf.mxu0
      %v1079 = vadd.f32 0.0, %v1078
      %v1080 = vpop.f32.mrf.mxu0
      %v1081 = vpop.f32.mrf.mxu0
      %v1082 = vadd.f32 0.0, %v1081
      %v1083 = vpop.f32.mrf.mxu0
      %1084 = vmatprep.mubr.bf16.mxu0 0
      %1085 = vmatmul.mubr.bf16.gmra.mxu0 %v994
      %v1086 = vpop.f32.mrf.mxu0
      %v1087 = vadd.f32 0.0, %v1086
      %v1088 = vpop.f32.mrf.mxu0
      %v1089 = vpop.f32.mrf.mxu0
      %v1090 = vadd.f32 0.0, %v1089
      %v1091 = vpop.f32.mrf.mxu0
      %1092 = vmatprep.mubr.bf16.mxu0 0
      %1093 = vmatmul.mubr.bf16.gmra.mxu0 %v995
      %v1094 = vpop.f32.mrf.mxu0
      %v1095 = vadd.f32 0.0, %v1094
      %v1096 = vpop.f32.mrf.mxu0
      %v1097 = vpop.f32.mrf.mxu0
      %v1098 = vadd.f32 0.0, %v1097
      %v1099 = vpop.f32.mrf.mxu0
      %1100 = vdwg.mxu0
      %v1101 = vlaneseq
      %v1102 = vand.u32 %v1101, 127
      %v1103 = vstv %s642
      %v1104 = vadd.s32 %v1103, %v1102
      %vm1105 = vcmp.lt.s32.totalorder %v1104, 200
      %v1106 = vsel %vm1105, %v1039, -1e+30
      %v1107 = vsel %vm1105, %v1042, -1e+30
      %v1108 = vsel %vm1105, %v1047, -1e+30
      %v1109 = vsel %vm1105, %v1050, -1e+30
      %v1110 = vsel %vm1105, %v1055, -1e+30
      %v1111 = vsel %vm1105, %v1058, -1e+30
      %v1112 = vsel %vm1105, %v1063, -1e+30
      %v1113 = vsel %vm1105, %v1066, -1e+30
      %v1114 = vsel %vm1105, %v1071, -1e+30
      %v1115 = vsel %vm1105, %v1074, -1e+30
      %v1116 = vsel %vm1105, %v1079, -1e+30
      %v1117 = vsel %vm1105, %v1082, -1e+30
      %v1118 = vsel %vm1105, %v1087, -1e+30
      %v1119 = vsel %vm1105, %v1090, -1e+30
      %v1120 = vsel %vm1105, %v1095, -1e+30
      %v1121 = vsel %vm1105, %v1098, -1e+30
      %v1122 = vld [vmem:[#allocation3] sm:$0xff]
      %v1123 = vld [vmem:[#allocation3 + $0x8] sm:$0xff]
      %v1124 = vld [vmem:[#allocation3 + $0x10] sm:$0xff]
      %v1125 = vld [vmem:[#allocation3 + $0x18] sm:$0xff]
      %v1126 = vld [vmem:[#allocation3 + $0x20] sm:$0xff]
      %v1127 = vld [vmem:[#allocation3 + $0x28] sm:$0xff]
      %v1128 = vld [vmem:[#allocation3 + $0x30] sm:$0xff]
      %v1129 = vld [vmem:[#allocation3 + $0x38] sm:$0xff]
      %v1130 = vld [vmem:[#allocation3 + $0x40] sm:$0xff]
      %v1131 = vld [vmem:[#allocation3 + $0x48] sm:$0xff]
      %v1132 = vld [vmem:[#allocation3 + $0x50] sm:$0xff]
      %v1133 = vld [vmem:[#allocation3 + $0x58] sm:$0xff]
      %v1134 = vld [vmem:[#allocation3 + $0x60] sm:$0xff]
      %v1135 = vld [vmem:[#allocation3 + $0x68] sm:$0xff]
      %v1136 = vld [vmem:[#allocation3 + $0x70] sm:$0xff]
      %v1137 = vld [vmem:[#allocation3 + $0x78] sm:$0xff]
      %1138 = vmax.xlane.f32.xlu0 %v1106
      %v1139 = vpop.xlane.xlu0 %1138
      %1140 = vmax.xlane.f32.xlu0 %v1107
      %v1141 = vpop.xlane.xlu0 %1140
      %1142 = vmax.xlane.f32.xlu0 %v1108
      %v1143 = vpop.xlane.xlu0 %1142
      %1144 = vmax.xlane.f32.xlu0 %v1109
      %v1145 = vpop.xlane.xlu0 %1144
      %1146 = vmax.xlane.f32.xlu0 %v1110
      %v1147 = vpop.xlane.xlu0 %1146
      %1148 = vmax.xlane.f32.xlu0 %v1111
      %v1149 = vpop.xlane.xlu0 %1148
      %1150 = vmax.xlane.f32.xlu0 %v1112
      %v1151 = vpop.xlane.xlu0 %1150
      %1152 = vmax.xlane.f32.xlu0 %v1113
      %v1153 = vpop.xlane.xlu0 %1152
      %1154 = vmax.xlane.f32.xlu0 %v1114
      %v1155 = vpop.xlane.xlu0 %1154
      %1156 = vmax.xlane.f32.xlu0 %v1115
      %v1157 = vpop.xlane.xlu0 %1156
      %1158 = vmax.xlane.f32.xlu0 %v1116
      %v1159 = vpop.xlane.xlu0 %1158
      %1160 = vmax.xlane.f32.xlu0 %v1117
      %v1161 = vpop.xlane.xlu0 %1160
      %1162 = vmax.xlane.f32.xlu0 %v1118
      %v1163 = vpop.xlane.xlu0 %1162
      %1164 = vmax.xlane.f32.xlu0 %v1119
      %v1165 = vpop.xlane.xlu0 %1164
      %1166 = vmax.xlane.f32.xlu0 %v1120
      %v1167 = vpop.xlane.xlu0 %1166
      %1168 = vmax.xlane.f32.xlu0 %v1121
      %v1169 = vpop.xlane.xlu0 %1168
      %v1170 = vmax.f32 %v1122, %v1139
      %v1171 = vmax.f32 %v1123, %v1141
      %v1172 = vmax.f32 %v1124, %v1143
      %v1173 = vmax.f32 %v1125, %v1145
      %v1174 = vmax.f32 %v1126, %v1147
      %v1175 = vmax.f32 %v1127, %v1149
      %v1176 = vmax.f32 %v1128, %v1151
      %v1177 = vmax.f32 %v1129, %v1153
      %v1178 = vmax.f32 %v1130, %v1155
      %v1179 = vmax.f32 %v1131, %v1157
      %v1180 = vmax.f32 %v1132, %v1159
      %v1181 = vmax.f32 %v1133, %v1161
      %v1182 = vmax.f32 %v1134, %v1163
      %v1183 = vmax.f32 %v1135, %v1165
      %v1184 = vmax.f32 %v1136, %v1167
      %v1185 = vmax.f32 %v1137, %v1169
      %v1186 = vsub.f32 %v1122, %v1170
      %v1187 = vsub.f32 %v1123, %v1171
      %v1188 = vsub.f32 %v1124, %v1172
      %v1189 = vsub.f32 %v1125, %v1173
      %v1190 = vsub.f32 %v1126, %v1174
      %v1191 = vsub.f32 %v1127, %v1175
      %v1192 = vsub.f32 %v1128, %v1176
      %v1193 = vsub.f32 %v1129, %v1177
      %v1194 = vsub.f32 %v1130, %v1178
      %v1195 = vsub.f32 %v1131, %v1179
      %v1196 = vsub.f32 %v1132, %v1180
      %v1197 = vsub.f32 %v1133, %v1181
      %v1198 = vsub.f32 %v1134, %v1182
      %v1199 = vsub.f32 %v1135, %v1183
      %v1200 = vsub.f32 %v1136, %v1184
      %v1201 = vsub.f32 %v1137, %v1185
      %v1202 = vmul.f32 %v1186, 1.442695
      %v1203 = vpow.pop %v1202
      %v1204 = vmul.f32 %v1187, 1.442695
      %v1205 = vpow.pop %v1204
      %v1206 = vmul.f32 %v1188, 1.442695
      %v1207 = vpow.pop %v1206
      %v1208 = vmul.f32 %v1189, 1.442695
      %v1209 = vpow.pop %v1208
      %v1210 = vmul.f32 %v1190, 1.442695
      %v1211 = vpow.pop %v1210
      %v1212 = vmul.f32 %v1191, 1.442695
      %v1213 = vpow.pop %v1212
      %v1214 = vmul.f32 %v1192, 1.442695
      %v1215 = vpow.pop %v1214
      %v1216 = vmul.f32 %v1193, 1.442695
      %v1217 = vpow.pop %v1216
      %v1218 = vmul.f32 %v1194, 1.442695
      %v1219 = vpow.pop %v1218
      %v1220 = vmul.f32 %v1195, 1.442695
      %v1221 = vpow.pop %v1220
      %v1222 = vmul.f32 %v1196, 1.442695
      %v1223 = vpow.pop %v1222
      %v1224 = vmul.f32 %v1197, 1.442695
      %v1225 = vpow.pop %v1224
      %v1226 = vmul.f32 %v1198, 1.442695
      %v1227 = vpow.pop %v1226
      %v1228 = vmul.f32 %v1199, 1.442695
      %v1229 = vpow.pop %v1228
      %v1230 = vmul.f32 %v1200, 1.442695
      %v1231 = vpow.pop %v1230
      %v1232 = vmul.f32 %v1201, 1.442695
      %v1233 = vpow.pop %v1232
      %1235 = vset.pattern.permute.xlu0 0
      %1236 = vperm.xlu0 %1235, %v1170
      %v1237 = vpop.permute.xlu0 %1236
      %1240 = vset.pattern.permute.xlu0 0
      %1241 = vperm.xlu0 %1240, %v1171
      %v1242 = vpop.permute.xlu0 %1241
      %1245 = vset.pattern.permute.xlu0 0
      %1246 = vperm.xlu0 %1245, %v1172
      %v1247 = vpop.permute.xlu0 %1246
      %1250 = vset.pattern.permute.xlu0 0
      %1251 = vperm.xlu0 %1250, %v1173
      %v1252 = vpop.permute.xlu0 %1251
      %1255 = vset.pattern.permute.xlu0 0
      %1256 = vperm.xlu0 %1255, %v1174
      %v1257 = vpop.permute.xlu0 %1256
      %1260 = vset.pattern.permute.xlu0 0
      %1261 = vperm.xlu0 %1260, %v1175
      %v1262 = vpop.permute.xlu0 %1261
      %1265 = vset.pattern.permute.xlu0 0
      %1266 = vperm.xlu0 %1265, %v1176
      %v1267 = vpop.permute.xlu0 %1266
      %1270 = vset.pattern.permute.xlu0 0
      %1271 = vperm.xlu0 %1270, %v1177
      %v1272 = vpop.permute.xlu0 %1271
      %1275 = vset.pattern.permute.xlu0 0
      %1276 = vperm.xlu0 %1275, %v1178
      %v1277 = vpop.permute.xlu0 %1276
      %1280 = vset.pattern.permute.xlu0 0
      %1281 = vperm.xlu0 %1280, %v1179
      %v1282 = vpop.permute.xlu0 %1281
      %1285 = vset.pattern.permute.xlu0 0
      %1286 = vperm.xlu0 %1285, %v1180
      %v1287 = vpop.permute.xlu0 %1286
      %1290 = vset.pattern.permute.xlu0 0
      %1291 = vperm.xlu0 %1290, %v1181
      %v1292 = vpop.permute.xlu0 %1291
      %1295 = vset.pattern.permute.xlu0 0
      %1296 = vperm.xlu0 %1295, %v1182
      %v1297 = vpop.permute.xlu0 %1296
      %1300 = vset.pattern.permute.xlu0 0
      %1301 = vperm.xlu0 %1300, %v1183
      %v1302 = vpop.permute.xlu0 %1301
      %1305 = vset.pattern.permute.xlu0 0
      %1306 = vperm.xlu0 %1305, %v1184
      %v1307 = vpop.permute.xlu0 %1306
      %1310 = vset.pattern.permute.xlu0 0
      %1311 = vperm.xlu0 %1310, %v1185
      %v1312 = vpop.permute.xlu0 %1311
      %v1314 = vsub.f32 %v1106, %v1237
      %v1315 = vsub.f32 %v1107, %v1242
      %v1316 = vsub.f32 %v1108, %v1247
      %v1317 = vsub.f32 %v1109, %v1252
      %v1318 = vsub.f32 %v1110, %v1257
      %v1319 = vsub.f32 %v1111, %v1262
      %v1320 = vsub.f32 %v1112, %v1267
      %v1321 = vsub.f32 %v1113, %v1272
      %v1322 = vsub.f32 %v1114, %v1277
      %v1323 = vsub.f32 %v1115, %v1282
      %v1324 = vsub.f32 %v1116, %v1287
      %v1325 = vsub.f32 %v1117, %v1292
      %v1326 = vsub.f32 %v1118, %v1297
      %v1327 = vsub.f32 %v1119, %v1302
      %v1328 = vsub.f32 %v1120, %v1307
      %v1329 = vsub.f32 %v1121, %v1312
      %v1330 = vmul.f32 %v1314, 1.442695
      %v1331 = vpow.pop %v1330
      %v1332 = vmul.f32 %v1315, 1.442695
      %v1333 = vpow.pop %v1332
      %v1334 = vmul.f32 %v1316, 1.442695
      %v1335 = vpow.pop %v1334
      %v1336 = vmul.f32 %v1317, 1.442695
      %v1337 = vpow.pop %v1336
      %v1338 = vmul.f32 %v1318, 1.442695
      %v1339 = vpow.pop %v1338
      %v1340 = vmul.f32 %v1319, 1.442695
      %v1341 = vpow.pop %v1340
      %v1342 = vmul.f32 %v1320, 1.442695
      %v1343 = vpow.pop %v1342
      %v1344 = vmul.f32 %v1321, 1.442695
      %v1345 = vpow.pop %v1344
      %v1346 = vmul.f32 %v1322, 1.442695
      %v1347 = vpow.pop %v1346
      %v1348 = vmul.f32 %v1323, 1.442695
      %v1349 = vpow.pop %v1348
      %v1350 = vmul.f32 %v1324, 1.442695
      %v1351 = vpow.pop %v1350
      %v1352 = vmul.f32 %v1325, 1.442695
      %v1353 = vpow.pop %v1352
      %v1354 = vmul.f32 %v1326, 1.442695
      %v1355 = vpow.pop %v1354
      %v1356 = vmul.f32 %v1327, 1.442695
      %v1357 = vpow.pop %v1356
      %v1358 = vmul.f32 %v1328, 1.442695
      %v1359 = vpow.pop %v1358
      %v1360 = vmul.f32 %v1329, 1.442695
      %v1361 = vpow.pop %v1360
      %v1362 = vld [vmem:[#allocation4] sm:$0xff]
      %v1363 = vld [vmem:[#allocation4 + $0x8] sm:$0xff]
      %v1364 = vld [vmem:[#allocation4 + $0x10] sm:$0xff]
      %v1365 = vld [vmem:[#allocation4 + $0x18] sm:$0xff]
      %v1366 = vld [vmem:[#allocation4 + $0x20] sm:$0xff]
      %v1367 = vld [vmem:[#allocation4 + $0x28] sm:$0xff]
      %v1368 = vld [vmem:[#allocation4 + $0x30] sm:$0xff]
      %v1369 = vld [vmem:[#allocation4 + $0x38] sm:$0xff]
      %v1370 = vld [vmem:[#allocation4 + $0x40] sm:$0xff]
      %v1371 = vld [vmem:[#allocation4 + $0x48] sm:$0xff]
      %v1372 = vld [vmem:[#allocation4 + $0x50] sm:$0xff]
      %v1373 = vld [vmem:[#allocation4 + $0x58] sm:$0xff]
      %v1374 = vld [vmem:[#allocation4 + $0x60] sm:$0xff]
      %v1375 = vld [vmem:[#allocation4 + $0x68] sm:$0xff]
      %v1376 = vld [vmem:[#allocation4 + $0x70] sm:$0xff]
      %v1377 = vld [vmem:[#allocation4 + $0x78] sm:$0xff]
      %v1378 = vmul.f32 %v1203, %v1362
      %v1379 = vmul.f32 %v1205, %v1363
      %v1380 = vmul.f32 %v1207, %v1364
      %v1381 = vmul.f32 %v1209, %v1365
      %v1382 = vmul.f32 %v1211, %v1366
      %v1383 = vmul.f32 %v1213, %v1367
      %v1384 = vmul.f32 %v1215, %v1368
      %v1385 = vmul.f32 %v1217, %v1369
      %v1386 = vmul.f32 %v1219, %v1370
      %v1387 = vmul.f32 %v1221, %v1371
      %v1388 = vmul.f32 %v1223, %v1372
      %v1389 = vmul.f32 %v1225, %v1373
      %v1390 = vmul.f32 %v1227, %v1374
      %v1391 = vmul.f32 %v1229, %v1375
      %v1392 = vmul.f32 %v1231, %v1376
      %v1393 = vmul.f32 %v1233, %v1377
      %1394 = vadd.xlane.f32.xlu0 %v1331
      %v1395 = vpop.xlane.xlu0 %1394
      %1396 = vadd.xlane.f32.xlu0 %v1333
      %v1397 = vpop.xlane.xlu0 %1396
      %1398 = vadd.xlane.f32.xlu0 %v1335
      %v1399 = vpop.xlane.xlu0 %1398
      %1400 = vadd.xlane.f32.xlu0 %v1337
      %v1401 = vpop.xlane.xlu0 %1400
      %1402 = vadd.xlane.f32.xlu0 %v1339
      %v1403 = vpop.xlane.xlu0 %1402
      %1404 = vadd.xlane.f32.xlu0 %v1341
      %v1405 = vpop.xlane.xlu0 %1404
      %1406 = vadd.xlane.f32.xlu0 %v1343
      %v1407 = vpop.xlane.xlu0 %1406
      %1408 = vadd.xlane.f32.xlu0 %v1345
      %v1409 = vpop.xlane.xlu0 %1408
      %1410 = vadd.xlane.f32.xlu0 %v1347
      %v1411 = vpop.xlane.xlu0 %1410
      %1412 = vadd.xlane.f32.xlu0 %v1349
      %v1413 = vpop.xlane.xlu0 %1412
      %1414 = vadd.xlane.f32.xlu0 %v1351
      %v1415 = vpop.xlane.xlu0 %1414
      %1416 = vadd.xlane.f32.xlu0 %v1353
      %v1417 = vpop.xlane.xlu0 %1416
      %1418 = vadd.xlane.f32.xlu0 %v1355
      %v1419 = vpop.xlane.xlu0 %1418
      %1420 = vadd.xlane.f32.xlu0 %v1357
      %v1421 = vpop.xlane.xlu0 %1420
      %1422 = vadd.xlane.f32.xlu0 %v1359
      %v1423 = vpop.xlane.xlu0 %1422
      %1424 = vadd.xlane.f32.xlu0 %v1361
      %v1425 = vpop.xlane.xlu0 %1424
      %v1426 = vadd.f32 %v1378, %v1395
      %v1427 = vadd.f32 %v1379, %v1397
      %v1428 = vadd.f32 %v1380, %v1399
      %v1429 = vadd.f32 %v1381, %v1401
      %v1430 = vadd.f32 %v1382, %v1403
      %v1431 = vadd.f32 %v1383, %v1405
      %v1432 = vadd.f32 %v1384, %v1407
      %v1433 = vadd.f32 %v1385, %v1409
      %v1434 = vadd.f32 %v1386, %v1411
      %v1435 = vadd.f32 %v1387, %v1413
      %v1436 = vadd.f32 %v1388, %v1415
      %v1437 = vadd.f32 %v1389, %v1417
      %v1438 = vadd.f32 %v1390, %v1419
      %v1439 = vadd.f32 %v1391, %v1421
      %v1440 = vadd.f32 %v1392, %v1423
      %v1441 = vadd.f32 %v1393, %v1425
      %vm1442 = vcmask 7168
      %1443 = vst.msk [vmem:[#allocation4] sm:$0xff] %vm1442, %v1426
      %1444 = vst.msk [vmem:[#allocation4 + $0x8] sm:$0xff] %vm1442, %v1427
      %1445 = vst.msk [vmem:[#allocation4 + $0x10] sm:$0xff] %vm1442, %v1428
      %1446 = vst.msk [vmem:[#allocation4 + $0x18] sm:$0xff] %vm1442, %v1429
      %1447 = vst.msk [vmem:[#allocation4 + $0x20] sm:$0xff] %vm1442, %v1430
      %1448 = vst.msk [vmem:[#allocation4 + $0x28] sm:$0xff] %vm1442, %v1431
      %1449 = vst.msk [vmem:[#allocation4 + $0x30] sm:$0xff] %vm1442, %v1432
      %1450 = vst.msk [vmem:[#allocation4 + $0x38] sm:$0xff] %vm1442, %v1433
      %1451 = vst.msk [vmem:[#allocation4 + $0x40] sm:$0xff] %vm1442, %v1434
      %1452 = vst.msk [vmem:[#allocation4 + $0x48] sm:$0xff] %vm1442, %v1435
      %1453 = vst.msk [vmem:[#allocation4 + $0x50] sm:$0xff] %vm1442, %v1436
      %1454 = vst.msk [vmem:[#allocation4 + $0x58] sm:$0xff] %vm1442, %v1437
      %1455 = vst.msk [vmem:[#allocation4 + $0x60] sm:$0xff] %vm1442, %v1438
      %1456 = vst.msk [vmem:[#allocation4 + $0x68] sm:$0xff] %vm1442, %v1439
      %1457 = vst.msk [vmem:[#allocation4 + $0x70] sm:$0xff] %vm1442, %v1440
      %1458 = vst.msk [vmem:[#allocation4 + $0x78] sm:$0xff] %vm1442, %v1441
      %v1459 = vld [vmem:[#allocation5] sm:$0xff]
      %v1460 = vld [vmem:[#allocation5 + $0x8] sm:$0xff]
      %v1461 = vld [vmem:[#allocation5 + $0x10] sm:$0xff]
      %v1462 = vld [vmem:[#allocation5 + $0x18] sm:$0xff]
      %v1463 = vld [vmem:[#allocation5 + $0x20] sm:$0xff]
      %v1464 = vld [vmem:[#allocation5 + $0x28] sm:$0xff]
      %v1465 = vld [vmem:[#allocation5 + $0x30] sm:$0xff]
      %v1466 = vld [vmem:[#allocation5 + $0x38] sm:$0xff]
      %v1467 = vld [vmem:[#allocation5 + $0x40] sm:$0xff]
      %v1468 = vld [vmem:[#allocation5 + $0x48] sm:$0xff]
      %v1469 = vld [vmem:[#allocation5 + $0x50] sm:$0xff]
      %v1470 = vld [vmem:[#allocation5 + $0x58] sm:$0xff]
      %v1471 = vld [vmem:[#allocation5 + $0x60] sm:$0xff]
      %v1472 = vld [vmem:[#allocation5 + $0x68] sm:$0xff]
      %v1473 = vld [vmem:[#allocation5 + $0x70] sm:$0xff]
      %v1474 = vld [vmem:[#allocation5 + $0x78] sm:$0xff]
      %1476 = vset.pattern.permute.xlu0 0
      %1477 = vperm.xlu0 %1476, %v1203
      %v1478 = vpop.permute.xlu0 %1477
      %1481 = vset.pattern.permute.xlu0 0
      %1482 = vperm.xlu0 %1481, %v1205
      %v1483 = vpop.permute.xlu0 %1482
      %1486 = vset.pattern.permute.xlu0 0
      %1487 = vperm.xlu0 %1486, %v1207
      %v1488 = vpop.permute.xlu0 %1487
      %1491 = vset.pattern.permute.xlu0 0
      %1492 = vperm.xlu0 %1491, %v1209
      %v1493 = vpop.permute.xlu0 %1492
      %1496 = vset.pattern.permute.xlu0 0
      %1497 = vperm.xlu0 %1496, %v1211
      %v1498 = vpop.permute.xlu0 %1497
      %1501 = vset.pattern.permute.xlu0 0
      %1502 = vperm.xlu0 %1501, %v1213
      %v1503 = vpop.permute.xlu0 %1502
      %1506 = vset.pattern.permute.xlu0 0
      %1507 = vperm.xlu0 %1506, %v1215
      %v1508 = vpop.permute.xlu0 %1507
      %1511 = vset.pattern.permute.xlu0 0
      %1512 = vperm.xlu0 %1511, %v1217
      %v1513 = vpop.permute.xlu0 %1512
      %1516 = vset.pattern.permute.xlu0 0
      %1517 = vperm.xlu0 %1516, %v1219
      %v1518 = vpop.permute.xlu0 %1517
      %1521 = vset.pattern.permute.xlu0 0
      %1522 = vperm.xlu0 %1521, %v1221
      %v1523 = vpop.permute.xlu0 %1522
      %1526 = vset.pattern.permute.xlu0 0
      %1527 = vperm.xlu0 %1526, %v1223
      %v1528 = vpop.permute.xlu0 %1527
      %1531 = vset.pattern.permute.xlu0 0
      %1532 = vperm.xlu0 %1531, %v1225
      %v1533 = vpop.permute.xlu0 %1532
      %1536 = vset.pattern.permute.xlu0 0
      %1537 = vperm.xlu0 %1536, %v1227
      %v1538 = vpop.permute.xlu0 %1537
      %1541 = vset.pattern.permute.xlu0 0
      %1542 = vperm.xlu0 %1541, %v1229
      %v1543 = vpop.permute.xlu0 %1542
      %1546 = vset.pattern.permute.xlu0 0
      %1547 = vperm.xlu0 %1546, %v1231
      %v1548 = vpop.permute.xlu0 %1547
      %1551 = vset.pattern.permute.xlu0 0
      %1552 = vperm.xlu0 %1551, %v1233
      %v1553 = vpop.permute.xlu0 %1552
      %v1555 = vmul.f32 %v1478, %v1459
      %v1556 = vmul.f32 %v1483, %v1460
      %v1557 = vmul.f32 %v1488, %v1461
      %v1558 = vmul.f32 %v1493, %v1462
      %v1559 = vmul.f32 %v1498, %v1463
      %v1560 = vmul.f32 %v1503, %v1464
      %v1561 = vmul.f32 %v1508, %v1465
      %v1562 = vmul.f32 %v1513, %v1466
      %v1563 = vmul.f32 %v1518, %v1467
      %v1564 = vmul.f32 %v1523, %v1468
      %v1565 = vmul.f32 %v1528, %v1469
      %v1566 = vmul.f32 %v1533, %v1470
      %v1567 = vmul.f32 %v1538, %v1471
      %v1568 = vmul.f32 %v1543, %v1472
      %v1569 = vmul.f32 %v1548, %v1473
      %v1570 = vmul.f32 %v1553, %v1474
      %v1571 = vpack.c.bf16 %v1333, %v1331
      %v1572 = vpack.c.bf16 %v1337, %v1335
      %v1573 = vpack.c.bf16 %v1341, %v1339
      %v1574 = vpack.c.bf16 %v1345, %v1343
      %v1575 = vpack.c.bf16 %v1349, %v1347
      %v1576 = vpack.c.bf16 %v1353, %v1351
      %v1577 = vpack.c.bf16 %v1357, %v1355
      %v1578 = vpack.c.bf16 %v1361, %v1359
      %v1579 = vpack.c.bf16 %v860, %v856
      %v1580 = vpack.c.bf16 %v870, %v866
      %v1581 = vpack.c.bf16 %v880, %v876
      %v1582 = vpack.c.bf16 %v890, %v886
      %v1583 = vpack.c.bf16 %v900, %v896
      %v1584 = vpack.c.bf16 %v910, %v906
      %v1585 = vpack.c.bf16 %v920, %v916
      %v1586 = vpack.c.bf16 %v930, %v926
      %1587 = vmatprep.subr.bf16.mxu0 0
      %1588 = vmatpush1.bf16.msra.mxu0 %v1586
      %1589 = vmatprep.subr.bf16.mxu0 0
      %1590 = vmatpush1.bf16.msra.mxu0 %v1585
      %1591 = vmatprep.subr.bf16.mxu0 0
      %1592 = vmatpush1.bf16.msra.mxu0 %v1584
      %1593 = vmatprep.subr.bf16.mxu0 0
      %1594 = vmatpush1.bf16.msra.mxu0 %v1583
      %1595 = vmatprep.subr.bf16.mxu0 0
      %1596 = vmatpush1.bf16.msra.mxu0 %v1582
      %1597 = vmatprep.subr.bf16.mxu0 0
      %1598 = vmatpush1.bf16.msra.mxu0 %v1581
      %1599 = vmatprep.subr.bf16.mxu0 0
      %1600 = vmatpush1.bf16.msra.mxu0 %v1580
      %1601 = vmatprep.subr.bf16.mxu0 0
      %1602 = vmatpush1.bf16.msra.mxu0 %v1579
      %1603 = vmatprep.subr.bf16.mxu0 0
      %1604 = vmatpush2.bf16.msra.mxu0 0
      %1605 = vmatprep.subr.bf16.mxu0 0
      %1606 = vmatpush2.bf16.msra.mxu0 0
      %1607 = vmatprep.subr.bf16.mxu0 0
      %1608 = vmatpush2.bf16.msra.mxu0 0
      %1609 = vmatprep.subr.bf16.mxu0 0
      %1610 = vmatpush2.bf16.msra.mxu0 0
      %1611 = vmatprep.subr.bf16.mxu0 0
      %1612 = vmatpush2.bf16.msra.mxu0 0
      %1613 = vmatprep.subr.bf16.mxu0 0
      %1614 = vmatpush2.bf16.msra.mxu0 0
      %1615 = vmatprep.subr.bf16.mxu0 0
      %1616 = vmatpush2.bf16.msra.mxu0 0
      %1617 = vmatprep.subr.bf16.mxu0 0
      %1618 = vmatpush2.bf16.msra.mxu0 0
      %1619 = vmatprep.mubr.bf16.mxu0 0
      %1620 = vmatmul.mubr.bf16.gmra.mxu0 %v1571
      %v1621 = vpop.f32.mrf.mxu0
      %v1622 = vadd.f32 0.0, %v1621
      %v1623 = vpop.f32.mrf.mxu0
      %v1624 = vpop.f32.mrf.mxu0
      %v1625 = vadd.f32 0.0, %v1624
      %v1626 = vpop.f32.mrf.mxu0
      %1627 = vmatprep.mubr.bf16.mxu0 0
      %1628 = vmatmul.mubr.bf16.gmra.mxu0 %v1572
      %v1629 = vpop.f32.mrf.mxu0
      %v1630 = vadd.f32 0.0, %v1629
      %v1631 = vpop.f32.mrf.mxu0
      %v1632 = vpop.f32.mrf.mxu0
      %v1633 = vadd.f32 0.0, %v1632
      %v1634 = vpop.f32.mrf.mxu0
      %1635 = vmatprep.mubr.bf16.mxu0 0
      %1636 = vmatmul.mubr.bf16.gmra.mxu0 %v1573
      %v1637 = vpop.f32.mrf.mxu0
      %v1638 = vadd.f32 0.0, %v1637
      %v1639 = vpop.f32.mrf.mxu0
      %v1640 = vpop.f32.mrf.mxu0
      %v1641 = vadd.f32 0.0, %v1640
      %v1642 = vpop.f32.mrf.mxu0
      %1643 = vmatprep.mubr.bf16.mxu0 0
      %1644 = vmatmul.mubr.bf16.gmra.mxu0 %v1574
      %v1645 = vpop.f32.mrf.mxu0
      %v1646 = vadd.f32 0.0, %v1645
      %v1647 = vpop.f32.mrf.mxu0
      %v1648 = vpop.f32.mrf.mxu0
      %v1649 = vadd.f32 0.0, %v1648
      %v1650 = vpop.f32.mrf.mxu0
      %1651 = vmatprep.mubr.bf16.mxu0 0
      %1652 = vmatmul.mubr.bf16.gmra.mxu0 %v1575
      %v1653 = vpop.f32.mrf.mxu0
      %v1654 = vadd.f32 0.0, %v1653
      %v1655 = vpop.f32.mrf.mxu0
      %v1656 = vpop.f32.mrf.mxu0
      %v1657 = vadd.f32 0.0, %v1656
      %v1658 = vpop.f32.mrf.mxu0
      %1659 = vmatprep.mubr.bf16.mxu0 0
      %1660 = vmatmul.mubr.bf16.gmra.mxu0 %v1576
      %v1661 = vpop.f32.mrf.mxu0
      %v1662 = vadd.f32 0.0, %v1661
      %v1663 = vpop.f32.mrf.mxu0
      %v1664 = vpop.f32.mrf.mxu0
      %v1665 = vadd.f32 0.0, %v1664
      %v1666 = vpop.f32.mrf.mxu0
      %1667 = vmatprep.mubr.bf16.mxu0 0
      %1668 = vmatmul.mubr.bf16.gmra.mxu0 %v1577
      %v1669 = vpop.f32.mrf.mxu0
      %v1670 = vadd.f32 0.0, %v1669
      %v1671 = vpop.f32.mrf.mxu0
      %v1672 = vpop.f32.mrf.mxu0
      %v1673 = vadd.f32 0.0, %v1672
      %v1674 = vpop.f32.mrf.mxu0
      %1675 = vmatprep.mubr.bf16.mxu0 0
      %1676 = vmatmul.mubr.bf16.gmra.mxu0 %v1578
      %v1677 = vpop.f32.mrf.mxu0
      %v1678 = vadd.f32 0.0, %v1677
      %v1679 = vpop.f32.mrf.mxu0
      %v1680 = vpop.f32.mrf.mxu0
      %v1681 = vadd.f32 0.0, %v1680
      %v1682 = vpop.f32.mrf.mxu0
      %1683 = vdwg.mxu0
      %v1684 = vadd.f32 %v1555, %v1622
      %v1685 = vadd.f32 %v1556, %v1625
      %v1686 = vadd.f32 %v1557, %v1630
      %v1687 = vadd.f32 %v1558, %v1633
      %v1688 = vadd.f32 %v1559, %v1638
      %v1689 = vadd.f32 %v1560, %v1641
      %v1690 = vadd.f32 %v1561, %v1646
      %v1691 = vadd.f32 %v1562, %v1649
      %v1692 = vadd.f32 %v1563, %v1654
      %v1693 = vadd.f32 %v1564, %v1657
      %v1694 = vadd.f32 %v1565, %v1662
      %v1695 = vadd.f32 %v1566, %v1665
      %v1696 = vadd.f32 %v1567, %v1670
      %v1697 = vadd.f32 %v1568, %v1673
      %v1698 = vadd.f32 %v1569, %v1678
      %v1699 = vadd.f32 %v1570, %v1681
      %1700 = vst [vmem:[#allocation5] sm:$0xff] %v1684
      %1701 = vst [vmem:[#allocation5 + $0x8] sm:$0xff] %v1685
      %1702 = vst [vmem:[#allocation5 + $0x10] sm:$0xff] %v1686
      %1703 = vst [vmem:[#allocation5 + $0x18] sm:$0xff] %v1687
      %1704 = vst [vmem:[#allocation5 + $0x20] sm:$0xff] %v1688
      %1705 = vst [vmem:[#allocation5 + $0x28] sm:$0xff] %v1689
      %1706 = vst [vmem:[#allocation5 + $0x30] sm:$0xff] %v1690
      %1707 = vst [vmem:[#allocation5 + $0x38] sm:$0xff] %v1691
      %1708 = vst [vmem:[#allocation5 + $0x40] sm:$0xff] %v1692
      %1709 = vst [vmem:[#allocation5 + $0x48] sm:$0xff] %v1693
      %1710 = vst [vmem:[#allocation5 + $0x50] sm:$0xff] %v1694
      %1711 = vst [vmem:[#allocation5 + $0x58] sm:$0xff] %v1695
      %1712 = vst [vmem:[#allocation5 + $0x60] sm:$0xff] %v1696
      %1713 = vst [vmem:[#allocation5 + $0x68] sm:$0xff] %v1697
      %1714 = vst [vmem:[#allocation5 + $0x70] sm:$0xff] %v1698
      %1715 = vst [vmem:[#allocation5 + $0x78] sm:$0xff] %v1699
      %1716 = vst.msk [vmem:[#allocation3] sm:$0xff] %vm1442, %v1170
      %1717 = vst.msk [vmem:[#allocation3 + $0x8] sm:$0xff] %vm1442, %v1171
      %1718 = vst.msk [vmem:[#allocation3 + $0x10] sm:$0xff] %vm1442, %v1172
      %1719 = vst.msk [vmem:[#allocation3 + $0x18] sm:$0xff] %vm1442, %v1173
      %1720 = vst.msk [vmem:[#allocation3 + $0x20] sm:$0xff] %vm1442, %v1174
      %1721 = vst.msk [vmem:[#allocation3 + $0x28] sm:$0xff] %vm1442, %v1175
      %1722 = vst.msk [vmem:[#allocation3 + $0x30] sm:$0xff] %vm1442, %v1176
      %1723 = vst.msk [vmem:[#allocation3 + $0x38] sm:$0xff] %vm1442, %v1177
      %1724 = vst.msk [vmem:[#allocation3 + $0x40] sm:$0xff] %vm1442, %v1178
      %1725 = vst.msk [vmem:[#allocation3 + $0x48] sm:$0xff] %vm1442, %v1179
      %1726 = vst.msk [vmem:[#allocation3 + $0x50] sm:$0xff] %vm1442, %v1180
      %1727 = vst.msk [vmem:[#allocation3 + $0x58] sm:$0xff] %vm1442, %v1181
      %1728 = vst.msk [vmem:[#allocation3 + $0x60] sm:$0xff] %vm1442, %v1182
      %1729 = vst.msk [vmem:[#allocation3 + $0x68] sm:$0xff] %vm1442, %v1183
      %1730 = vst.msk [vmem:[#allocation3 + $0x70] sm:$0xff] %vm1442, %v1184
      %1731 = vst.msk [vmem:[#allocation3 + $0x78] sm:$0xff] %vm1442, %v1185
      %p1732 = scmp.eq.s32.totalorder %s23, 1
      // Predicated region
      $region45: #{attention_forward.1} parent=39 // pred_check
        %p1733 = pneg %p1732
      $region46: #{attention_forward.1} parent=39 // pred_check_branch
        %1735 = sbr.rel (%p1733) target = $region48
      $region47: #{attention_forward.1} parent=39 // pred_region
        %v1736 = vld [vmem:[#allocation4] sm:$0xff]
        %v1737 = vld [vmem:[#allocation4 + $0x8] sm:$0xff]
        %v1738 = vld [vmem:[#allocation4 + $0x10] sm:$0xff]
        %v1739 = vld [vmem:[#allocation4 + $0x18] sm:$0xff]
        %v1740 = vld [vmem:[#allocation4 + $0x20] sm:$0xff]
        %v1741 = vld [vmem:[#allocation4 + $0x28] sm:$0xff]
        %v1742 = vld [vmem:[#allocation4 + $0x30] sm:$0xff]
        %v1743 = vld [vmem:[#allocation4 + $0x38] sm:$0xff]
        %v1744 = vld [vmem:[#allocation4 + $0x40] sm:$0xff]
        %v1745 = vld [vmem:[#allocation4 + $0x48] sm:$0xff]
        %v1746 = vld [vmem:[#allocation4 + $0x50] sm:$0xff]
        %v1747 = vld [vmem:[#allocation4 + $0x58] sm:$0xff]
        %v1748 = vld [vmem:[#allocation4 + $0x60] sm:$0xff]
        %v1749 = vld [vmem:[#allocation4 + $0x68] sm:$0xff]
        %v1750 = vld [vmem:[#allocation4 + $0x70] sm:$0xff]
        %v1751 = vld [vmem:[#allocation4 + $0x78] sm:$0xff]
        %v1752 = vrcp.pop %v1736
        %v1753 = vrcp.pop %v1737
        %v1754 = vrcp.pop %v1738
        %v1755 = vrcp.pop %v1739
        %v1756 = vrcp.pop %v1740
        %v1757 = vrcp.pop %v1741
        %v1758 = vrcp.pop %v1742
        %v1759 = vrcp.pop %v1743
        %v1760 = vrcp.pop %v1744
        %v1761 = vrcp.pop %v1745
        %v1762 = vrcp.pop %v1746
        %v1763 = vrcp.pop %v1747
        %v1764 = vrcp.pop %v1748
        %v1765 = vrcp.pop %v1749
        %v1766 = vrcp.pop %v1750
        %v1767 = vrcp.pop %v1751
        %v1768 = vld [vmem:[#allocation5] sm:$0xff]
        %v1769 = vld [vmem:[#allocation5 + $0x8] sm:$0xff]
        %v1770 = vld [vmem:[#allocation5 + $0x10] sm:$0xff]
        %v1771 = vld [vmem:[#allocation5 + $0x18] sm:$0xff]
        %v1772 = vld [vmem:[#allocation5 + $0x20] sm:$0xff]
        %v1773 = vld [vmem:[#allocation5 + $0x28] sm:$0xff]
        %v1774 = vld [vmem:[#allocation5 + $0x30] sm:$0xff]
        %v1775 = vld [vmem:[#allocation5 + $0x38] sm:$0xff]
        %v1776 = vld [vmem:[#allocation5 + $0x40] sm:$0xff]
        %v1777 = vld [vmem:[#allocation5 + $0x48] sm:$0xff]
        %v1778 = vld [vmem:[#allocation5 + $0x50] sm:$0xff]
        %v1779 = vld [vmem:[#allocation5 + $0x58] sm:$0xff]
        %v1780 = vld [vmem:[#allocation5 + $0x60] sm:$0xff]
        %v1781 = vld [vmem:[#allocation5 + $0x68] sm:$0xff]
        %v1782 = vld [vmem:[#allocation5 + $0x70] sm:$0xff]
        %v1783 = vld [vmem:[#allocation5 + $0x78] sm:$0xff]
        %1785 = vset.pattern.permute.xlu0 0
        %1786 = vperm.xlu0 %1785, %v1752
        %v1787 = vpop.permute.xlu0 %1786
        %1790 = vset.pattern.permute.xlu0 0
        %1791 = vperm.xlu0 %1790, %v1753
        %v1792 = vpop.permute.xlu0 %1791
        %1795 = vset.pattern.permute.xlu0 0
        %1796 = vperm.xlu0 %1795, %v1754
        %v1797 = vpop.permute.xlu0 %1796
        %1800 = vset.pattern.permute.xlu0 0
        %1801 = vperm.xlu0 %1800, %v1755
        %v1802 = vpop.permute.xlu0 %1801
        %1805 = vset.pattern.permute.xlu0 0
        %1806 = vperm.xlu0 %1805, %v1756
        %v1807 = vpop.permute.xlu0 %1806
        %1810 = vset.pattern.permute.xlu0 0
        %1811 = vperm.xlu0 %1810, %v1757
        %v1812 = vpop.permute.xlu0 %1811
        %1815 = vset.pattern.permute.xlu0 0
        %1816 = vperm.xlu0 %1815, %v1758
        %v1817 = vpop.permute.xlu0 %1816
        %1820 = vset.pattern.permute.xlu0 0
        %1821 = vperm.xlu0 %1820, %v1759
        %v1822 = vpop.permute.xlu0 %1821
        %1825 = vset.pattern.permute.xlu0 0
        %1826 = vperm.xlu0 %1825, %v1760
        %v1827 = vpop.permute.xlu0 %1826
        %1830 = vset.pattern.permute.xlu0 0
        %1831 = vperm.xlu0 %1830, %v1761
        %v1832 = vpop.permute.xlu0 %1831
        %1835 = vset.pattern.permute.xlu0 0
        %1836 = vperm.xlu0 %1835, %v1762
        %v1837 = vpop.permute.xlu0 %1836
        %1840 = vset.pattern.permute.xlu0 0
        %1841 = vperm.xlu0 %1840, %v1763
        %v1842 = vpop.permute.xlu0 %1841
        %1845 = vset.pattern.permute.xlu0 0
        %1846 = vperm.xlu0 %1845, %v1764
        %v1847 = vpop.permute.xlu0 %1846
        %1850 = vset.pattern.permute.xlu0 0
        %1851 = vperm.xlu0 %1850, %v1765
        %v1852 = vpop.permute.xlu0 %1851
        %1855 = vset.pattern.permute.xlu0 0
        %1856 = vperm.xlu0 %1855, %v1766
        %v1857 = vpop.permute.xlu0 %1856
        %1860 = vset.pattern.permute.xlu0 0
        %1861 = vperm.xlu0 %1860, %v1767
        %v1862 = vpop.permute.xlu0 %1861
        %v1864 = vmul.f32 %v1768, %v1787
        %v1865 = vmul.f32 %v1769, %v1792
        %v1866 = vmul.f32 %v1770, %v1797
        %v1867 = vmul.f32 %v1771, %v1802
        %v1868 = vmul.f32 %v1772, %v1807
        %v1869 = vmul.f32 %v1773, %v1812
        %v1870 = vmul.f32 %v1774, %v1817
        %v1871 = vmul.f32 %v1775, %v1822
        %v1872 = vmul.f32 %v1776, %v1827
        %v1873 = vmul.f32 %v1777, %v1832
        %v1874 = vmul.f32 %v1778, %v1837
        %v1875 = vmul.f32 %v1779, %v1842
        %v1876 = vmul.f32 %v1780, %v1847
        %v1877 = vmul.f32 %v1781, %v1852
        %v1878 = vmul.f32 %v1782, %v1857
        %v1879 = vmul.f32 %v1783, %v1862
        %1880 = vst [vmem:[%s253] sm:$0xff] %v1864
        %1881 = vst [vmem:[%s253 + $0x8] sm:$0xff] %v1865
        %1882 = vst [vmem:[%s253 + $0x10] sm:$0xff] %v1866
        %1883 = vst [vmem:[%s253 + $0x18] sm:$0xff] %v1867
        %1884 = vst [vmem:[%s253 + $0x20] sm:$0xff] %v1868
        %1885 = vst [vmem:[%s253 + $0x28] sm:$0xff] %v1869
        %1886 = vst [vmem:[%s253 + $0x30] sm:$0xff] %v1870
        %1887 = vst [vmem:[%s253 + $0x38] sm:$0xff] %v1871
        %1888 = vst [vmem:[%s253 + $0x40] sm:$0xff] %v1872
        %1889 = vst [vmem:[%s253 + $0x48] sm:$0xff] %v1873
        %1890 = vst [vmem:[%s253 + $0x50] sm:$0xff] %v1874
        %1891 = vst [vmem:[%s253 + $0x58] sm:$0xff] %v1875
        %1892 = vst [vmem:[%s253 + $0x60] sm:$0xff] %v1876
        %1893 = vst [vmem:[%s253 + $0x68] sm:$0xff] %v1877
        %1894 = vst [vmem:[%s253 + $0x70] sm:$0xff] %v1878
        %1895 = vst [vmem:[%s253 + $0x78] sm:$0xff] %v1879
      $region48: #{attention_forward.1} parent=39 // pred_fallthru
        _
      %s1896 = smul.u32 16, %s22
      %p1897 = scmp.lt.s32.totalorder %s21, 1
      %s1898 = scalar_select %p1897, %s21, 1
      %p1899 = scmp.lt.s32.totalorder %s1896, 31
      %s1900 = scalar_select %p1899, %s1896, 31
      %s1901 = smul.addr %s1898, 32
      %s1902 = sadd.s32 %s1900, %s1901
      %s1903 = smul.addr %s1902, 8
      %s1904 = scalar_lea.vmem %s5, %s1903
      // Predicated region
      $region49: #{attention_forward.1} parent=39 // pred_check
        %p1905 = pneg %p165
      $region50: #{attention_forward.1} parent=39 // pred_check_branch
        %1907 = sbr.rel (%p1905) target = $region52
      $region51: #{attention_forward.1} parent=39 // pred_region
        %s1908 = smul.u32 16, %s22
      $region52: #{attention_forward.1} parent=39 // pred_fallthru
        _
    $region40: #{attention_forward.1} parent=5 // pred_fallthru
      _
    %p1909 = scmp.le.s32.totalorder 2, %s11
    // Predicated region
    $region53: #{attention_forward.1} parent=5 // pred_check
      %p1910 = pneg %p1909
    $region54: #{attention_forward.1} parent=5 // pred_check_branch
      %1912 = sbr.rel (%p1910) target = $region56
    $region55: #{attention_forward.1} parent=5 // pred_region
      %s1913 = ssub.s32 %s11, 2
      // Predicated region
      $region57: #{attention_forward.1} parent=55 // pred_check
        %p1914 = pneg %p171
      $region58: #{attention_forward.1} parent=55 // pred_check_branch
        %1916 = sbr.rel (%p1914) target = $region60
      $region59: #{attention_forward.1} parent=55 // pred_region
        %s1917 = smul.u32 16, %s25
        %p1918 = scmp.lt.s32.totalorder %s24, 1
        %s1919 = scalar_select %p1918, %s24, 1
        %p1920 = scmp.lt.s32.totalorder %s1917, 31
        %s1921 = scalar_select %p1920, %s1917, 31
        %s1922 = smul.addr %s1919, 32
        %s1923 = sadd.s32 %s1921, %s1922
        %s1924 = smul.addr %s1923, 8
        %s1925 = scalar_lea.vmem %s5, %s1924
      $region60: #{attention_forward.1} parent=55 // pred_fallthru
        _
    $region56: #{attention_forward.1} parent=5 // pred_fallthru
      _
  $region6: #{attention_forward.1} parent=0 // loop_footer
    %s15 = sadd.s32 1, %s11
  $region7: #{attention_forward.1} parent=0 // loop_footer_branch
    %10 = sbr.rel target = $region3
  $region8: #{attention_forward.1} parent=0 // loop_exit
    _

</llo_original>
